<compile_context>
chip_gen: v6e
topology: v6e:2x2x1
jax: 0.10.0
libtpu: 0.0.40
codegen_flags: <defaults>
</compile_context>

<pallas_src>
import functools
import numpy as np
import jax
import jax.numpy as jnp
from jax.experimental import pallas as pl
from jax.experimental.pallas import tpu as pltpu


# ----------------------------------------------------------------------------
# Scaled-down hyper-parameters (consistent with the module's shape algebra).
class HP:
    max_map_channel = 16                 # mmc
    original_128 = 16                    # == mmc in this scaled config
    embed_x = 64                         # == MAPX
    embed_y = 64                         # == MAPY
    autoregressive_embedding_size = 64   # == rx*ry*1 (extra channel fed to `ds`)


MAPX = 64
MAPY = 64
# globals `minx, maxx, miny, maxy` in the original file -> fixed rectangle here
MINX, MAXX, MINY, MAXY = 4, 59, 4, 59


def action_involve_location_mask(action_type):
    # TODO(synk): the real helper is an external action-type lookup table; synthetic
    # deterministic rule: even action ids involve a location.
    return (action_type % 2 == 0)


# ----------------------------------------------------------------------------
# Pallas kernels
def _wx_bias_relu_kernel(w_ref, x_ref, b_ref, o_ref):
    # (M, K) @ (K, tn) in bf16, f32 accumulate; lane-dense output block.
    acc = jnp.dot(w_ref[...], x_ref[...], preferred_element_type=jnp.float32)
    o_ref[...] = jnp.maximum(acc + b_ref[...], 0.0)


def _wx_bias_relu_add_kernel(w_ref, x_ref, b_ref, r_ref, o_ref):
    acc = jnp.dot(w_ref[...], x_ref[...], preferred_element_type=jnp.float32)
    o_ref[...] = jnp.maximum(acc + b_ref[...], 0.0) + r_ref[...]


def _xw_bias_relu_add_kernel(x_ref, w_ref, b_ref, r_ref, o_ref):
    # row-major variant used for the tiny fc2 layer
    acc = jnp.dot(x_ref[...], w_ref[...], preferred_element_type=jnp.float32)
    o_ref[...] = jnp.maximum(acc + b_ref[...], 0.0) + r_ref[...]


def _masked_log_softmax_kernel(logits_ref, addmask_ref, masked_ref, logp_ref):
    m = logits_ref[...] + addmask_ref[...]          # (B,L) + (1,L): broadcast in-kernel
    masked_ref[...] = m
    mx = jnp.max(m, axis=-1, keepdims=True)
    lse = jnp.log(jnp.sum(jnp.exp(m - mx), axis=-1, keepdims=True)) + mx
    logp_ref[...] = m - lse


# ----------------------------------------------------------------------------
# Pallas wrappers
def wx_bias_relu(w, x, b_col, residual=None):
    """relu(w @ x + b) [+ residual] in the channels-on-sublanes / spatial-on-lanes layout.

    w: (M, K), x: (K, N), b_col: (M, 1) f32, residual: (M, N) f32 or None.
    w/x are fed to the MXU as bf16 (f32 accumulate); output blocks are lane-dense
    (tn multiple of 128 or the full N); 2 parallel lane blocks whenever N >= 256
    so both v7x TensorCores get work.
    """
    M, K = w.shape
    N = x.shape[1]
    if N >= 256 and (N // 2) % 128 == 0:
        tn = N // 2
    else:
        tn = N
    grid = (N // tn,)

    w_bf = w.astype(jnp.bfloat16)
    x_bf = x.astype(jnp.bfloat16)

    in_specs = [
        pl.BlockSpec((M, K), lambda i: (0, 0)),
        pl.BlockSpec((K, tn), lambda i: (0, i)),
        pl.BlockSpec((M, 1), lambda i: (0, 0)),
    ]
    args = [w_bf, x_bf, b_col]
    kernel = _wx_bias_relu_kernel
    if residual is not None:
        in_specs.append(pl.BlockSpec((M, tn), lambda i: (0, i)))
        args.append(residual)
        kernel = _wx_bias_relu_add_kernel

    return pl.pallas_call(
        kernel,
        out_shape=jax.ShapeDtypeStruct((M, N), jnp.float32),
        grid=grid,
        in_specs=in_specs,
        out_specs=pl.BlockSpec((M, tn), lambda i: (0, i)),
        compiler_params=pltpu.CompilerParams(dimension_semantics=("parallel",)),
    )(*args)


def fc2_relu_add(one_hot, w, b, residual):
    """new_ar = autoregressive_embedding + relu(one_hot @ W + b)  (single tiny kernel)."""
    B, K = one_hot.shape
    N = w.shape[1]
    return pl.pallas_call(
        _xw_bias_relu_add_kernel,
        out_shape=jax.ShapeDtypeStruct((B, N), jnp.float32),
        grid=(1,),
        in_specs=[pl.BlockSpec((B, K), lambda i: (0, 0)),
                  pl.BlockSpec((K, N), lambda i: (0, 0)),
                  pl.BlockSpec((1, N), lambda i: (0, 0)),
                  pl.BlockSpec((B, N), lambda i: (0, 0))],
        out_specs=pl.BlockSpec((B, N), lambda i: (0, 0)),
    )(one_hot, w, b.reshape(1, N), residual)


def masked_log_softmax(logits, addmask):
    """masked = logits + addmask ; log_probs = log_softmax(masked) — one kernel.

    addmask is passed as (1, L) and broadcast inside the kernel (no BxL HBM copy).
    """
    B, L = logits.shape
    return pl.pallas_call(
        _masked_log_softmax_kernel,
        out_shape=(jax.ShapeDtypeStruct((B, L), jnp.float32),
                   jax.ShapeDtypeStruct((B, L), jnp.float32)),
        grid=(1,),
        in_specs=[pl.BlockSpec((B, L), lambda i: (0, 0)),
                  pl.BlockSpec((1, L), lambda i: (0, 0))],
        out_specs=(pl.BlockSpec((B, L), lambda i: (0, 0)),
                   pl.BlockSpec((B, L), lambda i: (0, 0))),
    )(logits, addmask)


# ----------------------------------------------------------------------------
# Sub-pixel decomposition of ConvTranspose2d(k=4, s=2, p=1):
#   out[2m+ph, 2n+pw, co] = sum_{dh,dw,ci} x[m+dh-1, n+dw-1, ci] * w[ci, co, KH, KW]
# with (dh, kh) pairs: ph=0 -> {(0,3),(1,1)}, ph=1 -> {(1,2),(2,0)} (same for width),
# which follows from the transposed-conv index relation o = 2*i - 1 + k.
_PARITY_TAPS = {0: ((0, 3), (1, 1)), 1: ((1, 2), (2, 0))}


def pack_deconv_weight(w, b):
    """Pack PyTorch ConvTranspose2d weight (Cin,Cout,4,4) + bias for the sub-pixel matmul.

    Returns wt (4*Cout, 9*Cin) and bt (4*Cout, 1): row p*Cout+co is output parity
    p = ph*2+pw; column t*Cin+ci is the 3x3 im2col tap t = dh*3+dw (unused taps = 0).
    """
    w = np.asarray(w, np.float32)
    b = np.asarray(b, np.float32)
    Cin, Cout = w.shape[0], w.shape[1]
    wt = np.zeros((4 * Cout, 9 * Cin), np.float32)
    for ph in range(2):
        for pw in range(2):
            p = ph * 2 + pw
            for dh, kh in _PARITY_TAPS[ph]:
                for dw, kw in _PARITY_TAPS[pw]:
                    t = dh * 3 + dw
                    wt[p * Cout:(p + 1) * Cout, t * Cin:(t + 1) * Cin] = w[:, :, kh, kw].T
    bt = np.tile(b, 4).reshape(4 * Cout, 1)
    return jnp.asarray(wt, jnp.bfloat16), jnp.asarray(bt, jnp.float32)


def deconv4x4_s2_p1_relu(x_cbhw, wt, bt):
    """ReLU(ConvTranspose2d(k=4, s=2, p=1)) via the sub-pixel matmul.

    x_cbhw: (Cin, B, H, W) channels-leading.  The 9-tap im2col over the ORIGINAL
    input and the depth-to-space shuffle are pure data movement in XLA; matmul +
    bias + ReLU run in Pallas with a lane-dense (4*Cout, B*H*W) output.
    Returns (Cout, B, 2H, 2W).
    """
    Cin, B, H, W = x_cbhw.shape
    Cout = wt.shape[0] // 4
    xp = jnp.pad(x_cbhw, ((0, 0), (0, 0), (1, 1), (1, 1)))
    taps = [xp[:, :, dh:dh + H, dw:dw + W] for dh in range(3) for dw in range(3)]
    patches = jnp.stack(taps, axis=0).reshape(9 * Cin, B * H * W)
    out = wx_bias_relu(wt, patches, bt)                     # (4*Cout, B*H*W) f32
    out = out.reshape(2, 2, Cout, B, H, W)                  # (ph, pw, co, b, h, w)
    out = jnp.transpose(out, (2, 3, 4, 0, 5, 1))            # (co, b, h, ph, w, pw)
    return out.reshape(Cout, B, 2 * H, 2 * W)


# ----------------------------------------------------------------------------
# Parameters (deterministic synthetic init; shapes follow the module's __init__)
def init_params(key):
    mmc = HP.max_map_channel
    ks = jax.random.split(key, 10)

    def w(k, shape, scale):
        return jax.random.normal(k, shape, jnp.float32) * scale

    # additive mask, identical convention to the original: True inside the rectangle,
    # logits flattened row-major (x * MAPY + y)
    mask = np.zeros((MAPX, MAPY), dtype=bool)
    mask[MINX:MAXX + 1, MINY:MAXY + 1] = True
    addmask = (~mask).astype(np.float32).reshape(1, MAPX * MAPY) * -1e9

    us1_wt, us1_bt = pack_deconv_weight(w(ks[2], (mmc, mmc // 2, 4, 4), 0.1),
                                        w(ks[3], (mmc // 2,), 0.01))
    us2_wt, us2_bt = pack_deconv_weight(w(ks[4], (mmc // 2, mmc // 8, 4, 4), 0.1),
                                        w(ks[5], (mmc // 8,), 0.01))
    us3_wt, us3_bt = pack_deconv_weight(w(ks[6], (mmc // 8, 1, 4, 4), 0.1),
                                        w(ks[7], (1,), 0.01))

    params = {
        # ds: Conv2d(mmc+1 -> mmc, 1x1), stored transposed as (Cout, Cin), bf16 for MXU
        "ds_w": w(ks[0], (mmc, mmc + 1), 0.1).astype(jnp.bfloat16),
        "ds_b": w(ks[1], (mmc,), 0.01).reshape(mmc, 1),
        # ConvTranspose2d weights packed for the sub-pixel matmul: (4*Cout, 9*Cin) bf16
        "us1_w": us1_wt, "us1_b": us1_bt,
        "us2_w": us2_wt, "us2_b": us2_bt,
        "us3_w": us3_wt, "us3_b": us3_bt,
        # fc2: Linear(embed_x+embed_y -> autoregressive_embedding_size), stored (in, out)
        "fc2_w": w(ks[8], (HP.embed_x + HP.embed_y, HP.autoregressive_embedding_size), 0.1),
        "fc2_b": w(ks[9], (HP.autoregressive_embedding_size,), 0.01),
        "addmask": jnp.asarray(addmask),
    }
    # fc1 (Linear(1, 10)) exists in __init__ but is unused in forward(); omitted.
    return params


# ----------------------------------------------------------------------------
# Forward pass (mirrors LocationHead.forward)
def location_head_forward(params, autoregressive_embedding, map_skip, action_type, sample_key):
    B = action_type.shape[0]
    rx, ry = map_skip.shape[-2], map_skip.shape[-1]
    C = HP.original_128

    # Build the ds input directly in channels-leading (C, B, H, W) layout (glue).
    ms = jnp.broadcast_to(jnp.transpose(map_skip, (1, 0, 2, 3)), (C, B, rx, ry))   # expand()
    ar = jnp.transpose(autoregressive_embedding.reshape(B, -1, rx, ry), (1, 0, 2, 3))
    x = jnp.concatenate([ms, ar], axis=0)                          # (C+1, B, rx, ry)

    # ds: 1x1 conv + ReLU + residual add (one Pallas kernel, lane-dense output)
    # TODO(synk): could be fused into the us1 pallas_call via a VMEM scratch to save
    # one tiny HBM round-trip + launch; kept separate for clarity (activation is ~8 KiB).
    h = wx_bias_relu(params["ds_w"], x.reshape(C + 1, B * rx * ry),
                     params["ds_b"], residual=ms.reshape(C, B * rx * ry))
    h = h.reshape(C, B, rx, ry)

    # upsampling stack: sub-pixel ConvTranspose2d(4,2,1) + ReLU.
    # NOTE: ReLU after us3 matches the reference (`self.relu(self.us3(x))`).
    h = deconv4x4_s2_p1_relu(h, params["us1_w"], params["us1_b"])   # (mmc/2, B, 2rx, 2ry)
    h = deconv4x4_s2_p1_relu(h, params["us2_w"], params["us2_b"])   # (mmc/8, B, 4rx, 4ry)
    h = deconv4x4_s2_p1_relu(h, params["us3_w"], params["us3_b"])   # (1, B, 8rx, 8ry)

    logits = h.reshape(B, MAPX * MAPY)            # row-major (x*MAPY + y)

    # mask + log-softmax (Pallas reduction kernel, lane-dense (B, 4096) blocks)
    masked_logits, log_probs = masked_log_softmax(logits, params["addmask"])

    # Categorical sampling (RNG stays in the wrapper, deterministic key)
    location_id = jax.random.categorical(sample_key, masked_logits, axis=-1)
    log_prob = jnp.take_along_axis(log_probs, location_id[:, None], axis=1)[:, 0]
    location_mask = action_involve_location_mask(action_type).astype(jnp.float32)
    log_prob = log_prob * location_mask

    # location one-hot (glue) -> fc2 + ReLU + residual add (Pallas)
    loc_x = location_id // HP.embed_y
    loc_y = location_id % HP.embed_y
    one_hot = jnp.concatenate(
        [jax.nn.one_hot(loc_x, HP.embed_x, dtype=jnp.float32),
         jax.nn.one_hot(loc_y, HP.embed_y, dtype=jnp.float32)], axis=1)
    new_ar = fc2_relu_add(one_hot, params["fc2_w"], params["fc2_b"],
                          autoregressive_embedding)

    return location_id, log_prob, new_ar


# ----------------------------------------------------------------------------
if __name__ == "__main__":
    key = jax.random.PRNGKey(0)
    k_ar, k_map, k_sample = jax.random.split(key, 3)
    params = init_params(jax.random.PRNGKey(42))

    B = 2
    rx = ry = 8
    autoregressive_embedding = jax.random.normal(
        k_ar, (B, HP.autoregressive_embedding_size), jnp.float32)
    map_skip = jax.random.normal(k_map, (1, HP.original_128, rx, ry), jnp.float32)
    action_type = jnp.array([2, 5], dtype=jnp.int32)

    fwd = jax.jit(functools.partial(location_head_forward, params))
    location_id, log_prob, new_ar = fwd(autoregressive_embedding, map_skip,
                                        action_type, k_sample)
    jax.block_until_ready((location_id, log_prob, new_ar))
    print("KERNEL_OK")
</pallas_src>

<mosaic_0001>
module attributes {stable_mosaic.version = 11 : i64} {
  func.func @_wx_bias_relu_add_kernel(%arg0: i32, %arg1: memref<16x17xbf16, #tpu.memory_space<vmem>>, %arg2: memref<17x128xbf16, #tpu.memory_space<vmem>>, %arg3: memref<16x1xf32, #tpu.memory_space<vmem>>, %arg4: memref<16x128xf32, #tpu.memory_space<vmem>>, %arg5: memref<16x128xf32, #tpu.memory_space<vmem>>) attributes {dimension_semantics = [#tpu.dimension_semantics<parallel>], iteration_bounds = array<i64: 1>, scalar_prefetch = 0 : i64, scratch_operands = 0 : i64, tpu.core_type = #tpu.core_type<tc>, window_params = [{pipeline_mode = #tpu.pipeline_mode<synchronous>, transform_indices = @transform_0, window_bounds = array<i64: 16, 17>}, {transform_indices = @transform_1, window_bounds = array<i64: 17, 128>}, {pipeline_mode = #tpu.pipeline_mode<synchronous>, transform_indices = @transform_2, window_bounds = array<i64: 16, 1>}, {transform_indices = @transform_3, window_bounds = array<i64: 16, 128>}, {transform_indices = @transform_4, window_bounds = array<i64: 16, 128>}]} {
    %c0 = arith.constant 0 : index
    %c0_0 = arith.constant 0 : index
    %0 = vector.load %arg1[%c0, %c0_0] : memref<16x17xbf16, #tpu.memory_space<vmem>>, vector<16x17xbf16>
    %c0_1 = arith.constant 0 : index
    %c0_2 = arith.constant 0 : index
    %1 = vector.load %arg2[%c0_1, %c0_2] : memref<17x128xbf16, #tpu.memory_space<vmem>>, vector<17x128xbf16>
    %cst = arith.constant dense<0.000000e+00> : vector<16x128xf32>
    %2 = tpu.matmul %0, %1, %cst {dimension_numbers = #tpu.dot_dimension_numbers<[1], [0], [0], [1], [0, 0, 1, 1], [], []>} : vector<16x17xbf16>, vector<17x128xbf16>, vector<16x128xf32> -> vector<16x128xf32>
    %c0_3 = arith.constant 0 : index
    %c0_4 = arith.constant 0 : index
    %3 = vector.load %arg3[%c0_3, %c0_4] : memref<16x1xf32, #tpu.memory_space<vmem>>, vector<16x1xf32>
    %4 = vector.broadcast %3 : vector<16x1xf32> to vector<16x128xf32>
    %5 = arith.addf %2, %4 : vector<16x128xf32>
    %cst_5 = arith.constant 0.000000e+00 : f32
    %6 = vector.broadcast %cst_5 : f32 to vector<16x128xf32>
    %7 = arith.maximumf %5, %6 : vector<16x128xf32>
    %c0_6 = arith.constant 0 : index
    %c0_7 = arith.constant 0 : index
    %8 = vector.load %arg4[%c0_6, %c0_7] : memref<16x128xf32, #tpu.memory_space<vmem>>, vector<16x128xf32>
    %9 = arith.addf %7, %8 : vector<16x128xf32>
    %c0_8 = arith.constant 0 : index
    %c0_9 = arith.constant 0 : index
    %10 = vector.load %arg5[%c0_8, %c0_9] : memref<16x128xf32, #tpu.memory_space<vmem>>, vector<16x128xf32>
    tpu.vector_store %arg5[%c0_8, %c0_9], %9 {strides = array<i32>} : memref<16x128xf32, #tpu.memory_space<vmem>>, vector<16x128xf32>,
    return
  }
  func.func @transform_0(%arg0: i32) -> (i32, i32) {
    %c0_i32 = arith.constant 0 : i32
    %c0_i32_0 = arith.constant 0 : i32
    %c0_i32_1 = arith.constant 0 : i32
    return %c0_i32, %c0_i32_0 : i32, i32
  }
  func.func @transform_1(%arg0: i32) -> (i32, i32) {
    %c0_i32 = arith.constant 0 : i32
    %c0_i32_0 = arith.constant 0 : i32
    return %c0_i32, %arg0 : i32, i32
  }
  func.func @transform_2(%arg0: i32) -> (i32, i32) {
    %c0_i32 = arith.constant 0 : i32
    %c0_i32_0 = arith.constant 0 : i32
    %c0_i32_1 = arith.constant 0 : i32
    return %c0_i32, %c0_i32_0 : i32, i32
  }
  func.func @transform_3(%arg0: i32) -> (i32, i32) {
    %c0_i32 = arith.constant 0 : i32
    %c0_i32_0 = arith.constant 0 : i32
    return %c0_i32, %arg0 : i32, i32
  }
  func.func @transform_4(%arg0: i32) -> (i32, i32) {
    %c0_i32 = arith.constant 0 : i32
    %c0_i32_0 = arith.constant 0 : i32
    return %c0_i32, %arg0 : i32, i32
  }
}

module attributes {stable_mosaic.version = 11 : i64} {
  func.func @_wx_bias_relu_kernel(%arg0: i32, %arg1: memref<32x144xbf16, #tpu.memory_space<vmem>>, %arg2: memref<144x128xbf16, #tpu.memory_space<vmem>>, %arg3: memref<32x1xf32, #tpu.memory_space<vmem>>, %arg4: memref<32x128xf32, #tpu.memory_space<vmem>>) attributes {dimension_semantics = [#tpu.dimension_semantics<parallel>], iteration_bounds = array<i64: 1>, scalar_prefetch = 0 : i64, scratch_operands = 0 : i64, tpu.core_type = #tpu.core_type<tc>, window_params = [{pipeline_mode = #tpu.pipeline_mode<synchronous>, transform_indices = @transform_0, window_bounds = array<i64: 32, 144>}, {transform_indices = @transform_1, window_bounds = array<i64: 144, 128>}, {pipeline_mode = #tpu.pipeline_mode<synchronous>, transform_indices = @transform_2, window_bounds = array<i64: 32, 1>}, {transform_indices = @transform_3, window_bounds = array<i64: 32, 128>}]} {
    %c0 = arith.constant 0 : index
    %c0_0 = arith.constant 0 : index
    %0 = vector.load %arg1[%c0, %c0_0] : memref<32x144xbf16, #tpu.memory_space<vmem>>, vector<32x144xbf16>
    %c0_1 = arith.constant 0 : index
    %c0_2 = arith.constant 0 : index
    %1 = vector.load %arg2[%c0_1, %c0_2] : memref<144x128xbf16, #tpu.memory_space<vmem>>, vector<144x128xbf16>
    %cst = arith.constant dense<0.000000e+00> : vector<32x128xf32>
    %2 = tpu.matmul %0, %1, %cst {dimension_numbers = #tpu.dot_dimension_numbers<[1], [0], [0], [1], [0, 0, 1, 1], [], []>} : vector<32x144xbf16>, vector<144x128xbf16>, vector<32x128xf32> -> vector<32x128xf32>
    %c0_3 = arith.constant 0 : index
    %c0_4 = arith.constant 0 : index
    %3 = vector.load %arg3[%c0_3, %c0_4] : memref<32x1xf32, #tpu.memory_space<vmem>>, vector<32x1xf32>
    %4 = vector.broadcast %3 : vector<32x1xf32> to vector<32x128xf32>
    %5 = arith.addf %2, %4 : vector<32x128xf32>
    %cst_5 = arith.constant 0.000000e+00 : f32
    %6 = vector.broadcast %cst_5 : f32 to vector<32x128xf32>
    %7 = arith.maximumf %5, %6 : vector<32x128xf32>
    %c0_6 = arith.constant 0 : index
    %c0_7 = arith.constant 0 : index
    %8 = vector.load %arg4[%c0_6, %c0_7] : memref<32x128xf32, #tpu.memory_space<vmem>>, vector<32x128xf32>
    tpu.vector_store %arg4[%c0_6, %c0_7], %7 {strides = array<i32>} : memref<32x128xf32, #tpu.memory_space<vmem>>, vector<32x128xf32>,
    return
  }
  func.func @transform_0(%arg0: i32) -> (i32, i32) {
    %c0_i32 = arith.constant 0 : i32
    %c0_i32_0 = arith.constant 0 : i32
    %c0_i32_1 = arith.constant 0 : i32
    return %c0_i32, %c0_i32_0 : i32, i32
  }
  func.func @transform_1(%arg0: i32) -> (i32, i32) {
    %c0_i32 = arith.constant 0 : i32
    %c0_i32_0 = arith.constant 0 : i32
    return %c0_i32, %arg0 : i32, i32
  }
  func.func @transform_2(%arg0: i32) -> (i32, i32) {
    %c0_i32 = arith.constant 0 : i32
    %c0_i32_0 = arith.constant 0 : i32
    %c0_i32_1 = arith.constant 0 : i32
    return %c0_i32, %c0_i32_0 : i32, i32
  }
  func.func @transform_3(%arg0: i32) -> (i32, i32) {
    %c0_i32 = arith.constant 0 : i32
    %c0_i32_0 = arith.constant 0 : i32
    return %c0_i32, %arg0 : i32, i32
  }
}

module attributes {stable_mosaic.version = 11 : i64} {
  func.func @_wx_bias_relu_kernel(%arg0: i32, %arg1: memref<8x72xbf16, #tpu.memory_space<vmem>>, %arg2: memref<72x256xbf16, #tpu.memory_space<vmem>>, %arg3: memref<8x1xf32, #tpu.memory_space<vmem>>, %arg4: memref<8x256xf32, #tpu.memory_space<vmem>>) attributes {dimension_semantics = [#tpu.dimension_semantics<parallel>], iteration_bounds = array<i64: 2>, scalar_prefetch = 0 : i64, scratch_operands = 0 : i64, tpu.core_type = #tpu.core_type<tc>, window_params = [{pipeline_mode = #tpu.pipeline_mode<synchronous>, transform_indices = @transform_0, window_bounds = array<i64: 8, 72>}, {transform_indices = @transform_1, window_bounds = array<i64: 72, 256>}, {pipeline_mode = #tpu.pipeline_mode<synchronous>, transform_indices = @transform_2, window_bounds = array<i64: 8, 1>}, {transform_indices = @transform_3, window_bounds = array<i64: 8, 256>}]} {
    %c0 = arith.constant 0 : index
    %c0_0 = arith.constant 0 : index
    %0 = vector.load %arg1[%c0, %c0_0] : memref<8x72xbf16, #tpu.memory_space<vmem>>, vector<8x72xbf16>
    %c0_1 = arith.constant 0 : index
    %c0_2 = arith.constant 0 : index
    %1 = vector.load %arg2[%c0_1, %c0_2] : memref<72x256xbf16, #tpu.memory_space<vmem>>, vector<72x256xbf16>
    %cst = arith.constant dense<0.000000e+00> : vector<8x256xf32>
    %2 = tpu.matmul %0, %1, %cst {dimension_numbers = #tpu.dot_dimension_numbers<[1], [0], [0], [1], [0, 0, 1, 1], [], []>} : vector<8x72xbf16>, vector<72x256xbf16>, vector<8x256xf32> -> vector<8x256xf32>
    %c0_3 = arith.constant 0 : index
    %c0_4 = arith.constant 0 : index
    %3 = vector.load %arg3[%c0_3, %c0_4] : memref<8x1xf32, #tpu.memory_space<vmem>>, vector<8x1xf32>
    %4 = vector.broadcast %3 : vector<8x1xf32> to vector<8x256xf32>
    %5 = arith.addf %2, %4 : vector<8x256xf32>
    %cst_5 = arith.constant 0.000000e+00 : f32
    %6 = vector.broadcast %cst_5 : f32 to vector<8x256xf32>
    %7 = arith.maximumf %5, %6 : vector<8x256xf32>
    %c0_6 = arith.constant 0 : index
    %c0_7 = arith.constant 0 : index
    %8 = vector.load %arg4[%c0_6, %c0_7] : memref<8x256xf32, #tpu.memory_space<vmem>>, vector<8x256xf32>
    tpu.vector_store %arg4[%c0_6, %c0_7], %7 {strides = array<i32>} : memref<8x256xf32, #tpu.memory_space<vmem>>, vector<8x256xf32>,
    return
  }
  func.func @transform_0(%arg0: i32) -> (i32, i32) {
    %c0_i32 = arith.constant 0 : i32
    %c0_i32_0 = arith.constant 0 : i32
    %c0_i32_1 = arith.constant 0 : i32
    return %c0_i32, %c0_i32_0 : i32, i32
  }
  func.func @transform_1(%arg0: i32) -> (i32, i32) {
    %c0_i32 = arith.constant 0 : i32
    %c0_i32_0 = arith.constant 0 : i32
    return %c0_i32, %arg0 : i32, i32
  }
  func.func @transform_2(%arg0: i32) -> (i32, i32) {
    %c0_i32 = arith.constant 0 : i32
    %c0_i32_0 = arith.constant 0 : i32
    %c0_i32_1 = arith.constant 0 : i32
    return %c0_i32, %c0_i32_0 : i32, i32
  }
  func.func @transform_3(%arg0: i32) -> (i32, i32) {
    %c0_i32 = arith.constant 0 : i32
    %c0_i32_0 = arith.constant 0 : i32
    return %c0_i32, %arg0 : i32, i32
  }
}

module attributes {stable_mosaic.version = 11 : i64} {
  func.func @_wx_bias_relu_kernel(%arg0: i32, %arg1: memref<4x18xbf16, #tpu.memory_space<vmem>>, %arg2: memref<18x1024xbf16, #tpu.memory_space<vmem>>, %arg3: memref<4x1xf32, #tpu.memory_space<vmem>>, %arg4: memref<4x1024xf32, #tpu.memory_space<vmem>>) attributes {dimension_semantics = [#tpu.dimension_semantics<parallel>], iteration_bounds = array<i64: 2>, scalar_prefetch = 0 : i64, scratch_operands = 0 : i64, tpu.core_type = #tpu.core_type<tc>, window_params = [{pipeline_mode = #tpu.pipeline_mode<synchronous>, transform_indices = @transform_0, window_bounds = array<i64: 4, 18>}, {transform_indices = @transform_1, window_bounds = array<i64: 18, 1024>}, {pipeline_mode = #tpu.pipeline_mode<synchronous>, transform_indices = @transform_2, window_bounds = array<i64: 4, 1>}, {transform_indices = @transform_3, window_bounds = array<i64: 4, 1024>}]} {
    %c0 = arith.constant 0 : index
    %c0_0 = arith.constant 0 : index
    %0 = vector.load %arg1[%c0, %c0_0] : memref<4x18xbf16, #tpu.memory_space<vmem>>, vector<4x18xbf16>
    %c0_1 = arith.constant 0 : index
    %c0_2 = arith.constant 0 : index
    %1 = vector.load %arg2[%c0_1, %c0_2] : memref<18x1024xbf16, #tpu.memory_space<vmem>>, vector<18x1024xbf16>
    %cst = arith.constant dense<0.000000e+00> : vector<4x1024xf32>
    %2 = tpu.matmul %0, %1, %cst {dimension_numbers = #tpu.dot_dimension_numbers<[1], [0], [0], [1], [0, 0, 1, 1], [], []>} : vector<4x18xbf16>, vector<18x1024xbf16>, vector<4x1024xf32> -> vector<4x1024xf32>
    %c0_3 = arith.constant 0 : index
    %c0_4 = arith.constant 0 : index
    %3 = vector.load %arg3[%c0_3, %c0_4] : memref<4x1xf32, #tpu.memory_space<vmem>>, vector<4x1xf32>
    %4 = vector.broadcast %3 : vector<4x1xf32> to vector<4x1024xf32>
    %5 = arith.addf %2, %4 : vector<4x1024xf32>
    %cst_5 = arith.constant 0.000000e+00 : f32
    %6 = vector.broadcast %cst_5 : f32 to vector<4x1024xf32>
    %7 = arith.maximumf %5, %6 : vector<4x1024xf32>
    %c0_6 = arith.constant 0 : index
    %c0_7 = arith.constant 0 : index
    %8 = vector.load %arg4[%c0_6, %c0_7] : memref<4x1024xf32, #tpu.memory_space<vmem>>, vector<4x1024xf32>
    tpu.vector_store %arg4[%c0_6, %c0_7], %7 {strides = array<i32>} : memref<4x1024xf32, #tpu.memory_space<vmem>>, vector<4x1024xf32>,
    return
  }
  func.func @transform_0(%arg0: i32) -> (i32, i32) {
    %c0_i32 = arith.constant 0 : i32
    %c0_i32_0 = arith.constant 0 : i32
    %c0_i32_1 = arith.constant 0 : i32
    return %c0_i32, %c0_i32_0 : i32, i32
  }
  func.func @transform_1(%arg0: i32) -> (i32, i32) {
    %c0_i32 = arith.constant 0 : i32
    %c0_i32_0 = arith.constant 0 : i32
    return %c0_i32, %arg0 : i32, i32
  }
  func.func @transform_2(%arg0: i32) -> (i32, i32) {
    %c0_i32 = arith.constant 0 : i32
    %c0_i32_0 = arith.constant 0 : i32
    %c0_i32_1 = arith.constant 0 : i32
    return %c0_i32, %c0_i32_0 : i32, i32
  }
  func.func @transform_3(%arg0: i32) -> (i32, i32) {
    %c0_i32 = arith.constant 0 : i32
    %c0_i32_0 = arith.constant 0 : i32
    return %c0_i32, %arg0 : i32, i32
  }
}

module attributes {stable_mosaic.version = 11 : i64} {
  func.func @_masked_log_softmax_kernel(%arg0: i32, %arg1: memref<2x4096xf32, #tpu.memory_space<vmem>>, %arg2: memref<1x4096xf32, #tpu.memory_space<vmem>>, %arg3: memref<2x4096xf32, #tpu.memory_space<vmem>>, %arg4: memref<2x4096xf32, #tpu.memory_space<vmem>>) attributes {dimension_semantics = [#tpu.dimension_semantics<arbitrary>], iteration_bounds = array<i64: 1>, scalar_prefetch = 0 : i64, scratch_operands = 0 : i64, tpu.core_type = #tpu.core_type<tc>, window_params = [{pipeline_mode = #tpu.pipeline_mode<synchronous>, transform_indices = @transform_0, window_bounds = array<i64: 2, 4096>}, {pipeline_mode = #tpu.pipeline_mode<synchronous>, transform_indices = @transform_1, window_bounds = array<i64: 1, 4096>}, {pipeline_mode = #tpu.pipeline_mode<synchronous>, transform_indices = @transform_2, window_bounds = array<i64: 2, 4096>}, {pipeline_mode = #tpu.pipeline_mode<synchronous>, transform_indices = @transform_3, window_bounds = array<i64: 2, 4096>}]} {
    %c0 = arith.constant 0 : index
    %c0_0 = arith.constant 0 : index
    %0 = vector.load %arg1[%c0, %c0_0] : memref<2x4096xf32, #tpu.memory_space<vmem>>, vector<2x4096xf32>
    %c0_1 = arith.constant 0 : index
    %c0_2 = arith.constant 0 : index
    %1 = vector.load %arg2[%c0_1, %c0_2] : memref<1x4096xf32, #tpu.memory_space<vmem>>, vector<1x4096xf32>
    %2 = vector.broadcast %1 : vector<1x4096xf32> to vector<2x4096xf32>
    %3 = arith.addf %0, %2 : vector<2x4096xf32>
    %c0_3 = arith.constant 0 : index
    %c0_4 = arith.constant 0 : index
    %4 = vector.load %arg3[%c0_3, %c0_4] : memref<2x4096xf32, #tpu.memory_space<vmem>>, vector<2x4096xf32>
    tpu.vector_store %arg3[%c0_3, %c0_4], %3 {strides = array<i32>} : memref<2x4096xf32, #tpu.memory_space<vmem>>, vector<2x4096xf32>,
    %cst = arith.constant dense<0xFF800000> : vector<2xf32>
    %5 = vector.multi_reduction <maximumf>, %3, %cst [1] : vector<2x4096xf32> to vector<2xf32>
    %6 = vector.shape_cast %5 : vector<2xf32> to vector<2x1xf32>
    %7 = vector.broadcast %6 : vector<2x1xf32> to vector<2x4096xf32>
    %8 = arith.subf %3, %7 : vector<2x4096xf32>
    %9 = math.exp %8 : vector<2x4096xf32>
    %cst_5 = arith.constant dense<0.000000e+00> : vector<2xf32>
    %10 = vector.multi_reduction <add>, %9, %cst_5 [1] : vector<2x4096xf32> to vector<2xf32>
    %11 = vector.shape_cast %10 : vector<2xf32> to vector<2x1xf32>
    %12 = math.log %11 : vector<2x1xf32>
    %13 = arith.addf %12, %6 : vector<2x1xf32>
    %14 = vector.broadcast %13 : vector<2x1xf32> to vector<2x4096xf32>
    %15 = arith.subf %3, %14 : vector<2x4096xf32>
    %c0_6 = arith.constant 0 : index
    %c0_7 = arith.constant 0 : index
    %16 = vector.load %arg4[%c0_6, %c0_7] : memref<2x4096xf32, #tpu.memory_space<vmem>>, vector<2x4096xf32>
    tpu.vector_store %arg4[%c0_6, %c0_7], %15 {strides = array<i32>} : memref<2x4096xf32, #tpu.memory_space<vmem>>, vector<2x4096xf32>,
    return
  }
  func.func @transform_0(%arg0: i32) -> (i32, i32) {
    %c0_i32 = arith.constant 0 : i32
    %c0_i32_0 = arith.constant 0 : i32
    %c0_i32_1 = arith.constant 0 : i32
    return %c0_i32, %c0_i32_0 : i32, i32
  }
  func.func @transform_1(%arg0: i32) -> (i32, i32) {
    %c0_i32 = arith.constant 0 : i32
    %c0_i32_0 = arith.constant 0 : i32
    %c0_i32_1 = arith.constant 0 : i32
    return %c0_i32, %c0_i32_0 : i32, i32
  }
  func.func @transform_2(%arg0: i32) -> (i32, i32) {
    %c0_i32 = arith.constant 0 : i32
    %c0_i32_0 = arith.constant 0 : i32
    %c0_i32_1 = arith.constant 0 : i32
    return %c0_i32, %c0_i32_0 : i32, i32
  }
  func.func @transform_3(%arg0: i32) -> (i32, i32) {
    %c0_i32 = arith.constant 0 : i32
    %c0_i32_0 = arith.constant 0 : i32
    %c0_i32_1 = arith.constant 0 : i32
    return %c0_i32, %c0_i32_0 : i32, i32
  }
}

module attributes {stable_mosaic.version = 11 : i64} {
  func.func @_xw_bias_relu_add_kernel(%arg0: i32, %arg1: memref<2x128xf32, #tpu.memory_space<vmem>>, %arg2: memref<128x64xf32, #tpu.memory_space<vmem>>, %arg3: memref<1x64xf32, #tpu.memory_space<vmem>>, %arg4: memref<2x64xf32, #tpu.memory_space<vmem>>, %arg5: memref<2x64xf32, #tpu.memory_space<vmem>>) attributes {dimension_semantics = [#tpu.dimension_semantics<arbitrary>], iteration_bounds = array<i64: 1>, scalar_prefetch = 0 : i64, scratch_operands = 0 : i64, tpu.core_type = #tpu.core_type<tc>, window_params = [{pipeline_mode = #tpu.pipeline_mode<synchronous>, transform_indices = @transform_0, window_bounds = array<i64: 2, 128>}, {pipeline_mode = #tpu.pipeline_mode<synchronous>, transform_indices = @transform_1, window_bounds = array<i64: 128, 64>}, {pipeline_mode = #tpu.pipeline_mode<synchronous>, transform_indices = @transform_2, window_bounds = array<i64: 1, 64>}, {pipeline_mode = #tpu.pipeline_mode<synchronous>, transform_indices = @transform_3, window_bounds = array<i64: 2, 64>}, {pipeline_mode = #tpu.pipeline_mode<synchronous>, transform_indices = @transform_4, window_bounds = array<i64: 2, 64>}]} {
    %c0 = arith.constant 0 : index
    %c0_0 = arith.constant 0 : index
    %0 = vector.load %arg1[%c0, %c0_0] : memref<2x128xf32, #tpu.memory_space<vmem>>, vector<2x128xf32>
    %c0_1 = arith.constant 0 : index
    %c0_2 = arith.constant 0 : index
    %1 = vector.load %arg2[%c0_1, %c0_2] : memref<128x64xf32, #tpu.memory_space<vmem>>, vector<128x64xf32>
    %cst = arith.constant dense<0.000000e+00> : vector<2x64xf32>
    %2 = tpu.matmul %0, %1, %cst {dimension_numbers = #tpu.dot_dimension_numbers<[1], [0], [0], [1], [0, 0, 1, 1], [], []>} : vector<2x128xf32>, vector<128x64xf32>, vector<2x64xf32> -> vector<2x64xf32>
    %c0_3 = arith.constant 0 : index
    %c0_4 = arith.constant 0 : index
    %3 = vector.load %arg3[%c0_3, %c0_4] : memref<1x64xf32, #tpu.memory_space<vmem>>, vector<1x64xf32>
    %4 = vector.broadcast %3 : vector<1x64xf32> to vector<2x64xf32>
    %5 = arith.addf %2, %4 : vector<2x64xf32>
    %cst_5 = arith.constant 0.000000e+00 : f32
    %6 = vector.broadcast %cst_5 : f32 to vector<2x64xf32>
    %7 = arith.maximumf %5, %6 : vector<2x64xf32>
    %c0_6 = arith.constant 0 : index
    %c0_7 = arith.constant 0 : index
    %8 = vector.load %arg4[%c0_6, %c0_7] : memref<2x64xf32, #tpu.memory_space<vmem>>, vector<2x64xf32>
    %9 = arith.addf %7, %8 : vector<2x64xf32>
    %c0_8 = arith.constant 0 : index
    %c0_9 = arith.constant 0 : index
    %10 = vector.load %arg5[%c0_8, %c0_9] : memref<2x64xf32, #tpu.memory_space<vmem>>, vector<2x64xf32>
    tpu.vector_store %arg5[%c0_8, %c0_9], %9 {strides = array<i32>} : memref<2x64xf32, #tpu.memory_space<vmem>>, vector<2x64xf32>,
    return
  }
  func.func @transform_0(%arg0: i32) -> (i32, i32) {
    %c0_i32 = arith.constant 0 : i32
    %c0_i32_0 = arith.constant 0 : i32
    %c0_i32_1 = arith.constant 0 : i32
    return %c0_i32, %c0_i32_0 : i32, i32
  }
  func.func @transform_1(%arg0: i32) -> (i32, i32) {
    %c0_i32 = arith.constant 0 : i32
    %c0_i32_0 = arith.constant 0 : i32
    %c0_i32_1 = arith.constant 0 : i32
    return %c0_i32, %c0_i32_0 : i32, i32
  }
  func.func @transform_2(%arg0: i32) -> (i32, i32) {
    %c0_i32 = arith.constant 0 : i32
    %c0_i32_0 = arith.constant 0 : i32
    %c0_i32_1 = arith.constant 0 : i32
    return %c0_i32, %c0_i32_0 : i32, i32
  }
  func.func @transform_3(%arg0: i32) -> (i32, i32) {
    %c0_i32 = arith.constant 0 : i32
    %c0_i32_0 = arith.constant 0 : i32
    %c0_i32_1 = arith.constant 0 : i32
    return %c0_i32, %c0_i32_0 : i32, i32
  }
  func.func @transform_4(%arg0: i32) -> (i32, i32) {
    %c0_i32 = arith.constant 0 : i32
    %c0_i32_0 = arith.constant 0 : i32
    %c0_i32_1 = arith.constant 0 : i32
    return %c0_i32, %c0_i32_0 : i32, i32
  }
}

</mosaic_0001>

<llo_original>
// kernel: location_head_forward.6
$region0: #{location_head_forward.6}
  #allocation0 [shape = 'u32[]', space=smem, size = 0x4, offset = 0x4, fixed_abs, tag = 'smem constant byte address 0x4 - core index']
  #allocation1 [shape = 'u32[144,128]{1,0:T(1,128)}', space=vmem, size = 0x12000, scoped, tag = 'internal scratch']
  %s0 = inlined_call_operand.hbm [shape: bf16[16,17], index: 0, kind: input, shape index: {}]
  %s1 = inlined_call_operand.vmem [shape: bf16[17,128], index: 1, kind: input, shape index: {}]
  %s2 = inlined_call_operand.hbm [shape: f32[16,1], index: 2, kind: input, shape index: {}]
  %s3 = inlined_call_operand.vmem [shape: f32[16,128], index: 3, kind: input, shape index: {}]
  %s4 = inlined_call_operand.vmem [shape: f32[16,128], index: 4, kind: output, shape index: {}]
  %s5 = sld [smem:[#allocation0]]
  $region34: #{location_head_forward.6} parent=0
    _
  %s7 = ssub.s32 1, %s5
  %s8 = scalar_select 0, %s7, %s5
  $region1: #{location_head_forward.6} parent=0
    #allocation2 [shape = 'u8[4096]{0}', space=vmem, size = 0x1000, scoped, tag = 'input window, operand 0, single buffered']
    #allocation3 [shape = 's32[1]{0}', space=sflag, size = 0x4, scoped, tag = 'scoped memory for location_head_forward.6']
    #allocation4 [shape = 'u8[8192]{0}', space=vmem, size = 0x2000, scoped, tag = 'input window, operand 2, single buffered']
    #allocation5 [shape = 's32[1]{0}', space=sflag, size = 0x4, scoped, tag = 'scoped memory for location_head_forward.6']
    %9 = vsyncpa [#allocation3], 0
    %10 = vsyncpa [#allocation5], 0
    // Predicated region
    $region2: #{location_head_forward.6} parent=1 // pred_check
      _
    $region3: #{location_head_forward.6} parent=1 // pred_check_branch
      %12 = sbr.rel (0) target = $region5
    $region4: #{location_head_forward.6} parent=1 // pred_region
      %s14 = ssub.s32 128, 128
      %15 = vsyncadd [#allocation3], %s14
      %s16 = sshll.u32 [#allocation2], 4
      %s17 = int_to_ptr.vmem [resolvable:$true] %s16
      %22 = dma.hbm_to_vmem [thread:$0]  %s0, 128, %s17, [#allocation3], 64, 64, 4
    $region5: #{location_head_forward.6} parent=1 // pred_fallthru
      _
    // Predicated region
    $region6: #{location_head_forward.6} parent=1 // pred_check
      _
    $region7: #{location_head_forward.6} parent=1 // pred_check_branch
      %24 = sbr.rel (0) target = $region9
    $region8: #{location_head_forward.6} parent=1 // pred_region
      _
    $region9: #{location_head_forward.6} parent=1 // pred_fallthru
      _
    // Predicated region
    $region10: #{location_head_forward.6} parent=1 // pred_check
      _
    $region11: #{location_head_forward.6} parent=1 // pred_check_branch
      %26 = sbr.rel (0) target = $region13
    $region12: #{location_head_forward.6} parent=1 // pred_region
      %s28 = ssub.s32 256, 256
      %29 = vsyncadd [#allocation5], %s28
      %s30 = sshll.u32 [#allocation4], 4
      %s31 = int_to_ptr.vmem [resolvable:$true] %s30
      %36 = dma.hbm_to_vmem [thread:$0]  %s2, 256, %s31, [#allocation5], 128, 128, 8
    $region13: #{location_head_forward.6} parent=1 // pred_fallthru
      _
    // Predicated region
    $region14: #{location_head_forward.6} parent=1 // pred_check
      _
    $region15: #{location_head_forward.6} parent=1 // pred_check_branch
      %38 = sbr.rel (0) target = $region17
    $region16: #{location_head_forward.6} parent=1 // pred_region
      _
    $region17: #{location_head_forward.6} parent=1 // pred_fallthru
      _
    // Predicated region
    $region18: #{location_head_forward.6} parent=1 // pred_check
      _
    $region19: #{location_head_forward.6} parent=1 // pred_check_branch
      %40 = sbr.rel (0) target = $region21
    $region20: #{location_head_forward.6} parent=1 // pred_region
      %41 = dma.done [#allocation3], 128
    $region21: #{location_head_forward.6} parent=1 // pred_fallthru
      _
    // Predicated region
    $region22: #{location_head_forward.6} parent=1 // pred_check
      _
    $region23: #{location_head_forward.6} parent=1 // pred_check_branch
      %43 = sbr.rel (0) target = $region25
    $region24: #{location_head_forward.6} parent=1 // pred_region
      %44 = dma.done [#allocation5], 256
    $region25: #{location_head_forward.6} parent=1 // pred_fallthru
      _
    %v46 = vld [vmem:[#allocation2] sm:$0xf]
    %v47 = vld [vmem:[#allocation2 + $0x4] sm:$0xf]
    %v48 = vld [vmem:[%s1] sm:$0xf]
    %v49 = vld [vmem:[%s1 + $0x4] sm:$0xf]
    %v50 = vld [vmem:[%s1 + $0x8] sm:$0x1]
    %v51 = vld [vmem:[#allocation4] sm:$0xff]
    %v52 = vld [vmem:[#allocation4 + $0x8] sm:$0xff]
    %54 = vset.pattern.permute.xlu0 0
    %55 = vperm.xlu0 %54, %v51
    %v56 = vpop.permute.xlu0 %55
    %59 = vset.pattern.permute.xlu0 0
    %60 = vperm.xlu0 %59, %v52
    %v61 = vpop.permute.xlu0 %60
    %v65 = vunpack.c.l.b16 %v46
    %v66 = vunpack.c.l.b16 %v47
    %v67 = vpack.c.b16 %v66, %v65
    %v71 = vunpack.c.l.b16 %v48
    %v72 = vunpack.c.l.b16 %v49
    %v73 = vunpack.c.l.b16 %v50
    %v74 = vpack.c.b16 %v72, %v71
    %v75 = vpack.c.b16 %v73, %v73
    %vm77 = vcmask 138240
    %v79 = vsel %vm77, %v67, 0
    %vm81 = vcmask 1040384
    %v82 = vsel 0, 4294967295, 65535
    %v83 = vsel %vm81, %v82, 0
    %v85 = vand.u32 %v75, %v83
    %87 = vmatprep.subr.bf16.mxu0 0
    %88 = vmatpush1.bf16.msra.mxu0 0
    %89 = vmatprep.subr.bf16.mxu0 0
    %90 = vmatpush1.bf16.msra.mxu0 0
    %91 = vmatprep.subr.bf16.mxu0 0
    %92 = vmatpush1.bf16.msra.mxu0 0
    %93 = vmatprep.subr.bf16.mxu0 0
    %94 = vmatpush1.bf16.msra.mxu0 0
    %95 = vmatprep.subr.bf16.mxu0 0
    %96 = vmatpush1.bf16.msra.mxu0 0
    %97 = vmatprep.subr.bf16.mxu0 0
    %98 = vmatpush1.bf16.msra.mxu0 0
    %99 = vmatprep.subr.bf16.mxu0 0
    %100 = vmatpush1.bf16.msra.mxu0 %v85
    %101 = vmatprep.subr.bf16.mxu0 0
    %102 = vmatpush1.bf16.msra.mxu0 %v74
    %103 = vmatprep.subr.bf16.mxu0 0
    %104 = vmatpush2.bf16.msra.mxu0 0
    %105 = vmatprep.subr.bf16.mxu0 0
    %106 = vmatpush2.bf16.msra.mxu0 0
    %107 = vmatprep.subr.bf16.mxu0 0
    %108 = vmatpush2.bf16.msra.mxu0 0
    %109 = vmatprep.subr.bf16.mxu0 0
    %110 = vmatpush2.bf16.msra.mxu0 0
    %111 = vmatprep.subr.bf16.mxu0 0
    %112 = vmatpush2.bf16.msra.mxu0 0
    %113 = vmatprep.subr.bf16.mxu0 0
    %114 = vmatpush2.bf16.msra.mxu0 0
    %115 = vmatprep.subr.bf16.mxu0 0
    %116 = vmatpush2.bf16.msra.mxu0 0
    %117 = vmatprep.subr.bf16.mxu0 0
    %118 = vmatpush2.bf16.msra.mxu0 0
    %119 = vmatprep.mubr.bf16.mxu0 0
    %120 = vmatmul.mubr.bf16.gmra.mxu0 %v79
    %v121 = vpop.f32.mrf.mxu0
    %v122 = vadd.f32 %v56, %v121
    %v123 = vpop.f32.mrf.mxu0
    %v124 = vpop.f32.mrf.mxu0
    %v125 = vadd.f32 %v61, %v124
    %v126 = vpop.f32.mrf.mxu0
    %127 = vdwg.mxu0
    %v128 = vmax.f32 %v122, 0.0
    %v129 = vmax.f32 %v125, 0.0
    %v130 = vld [vmem:[%s3] sm:$0xff]
    %v131 = vld [vmem:[%s3 + $0x8] sm:$0xff]
    %v132 = vadd.f32 %v128, %v130
    %v133 = vadd.f32 %v129, %v131
    %134 = vst [vmem:[%s4] sm:$0xff] %v132
    %135 = vst [vmem:[%s4 + $0x8] sm:$0xff] %v133
    // Predicated region
    $region26: #{location_head_forward.6} parent=1 // pred_check
      _
    $region27: #{location_head_forward.6} parent=1 // pred_check_branch
      %137 = sbr.rel (0) target = $region29
    $region28: #{location_head_forward.6} parent=1 // pred_region
      _
    $region29: #{location_head_forward.6} parent=1 // pred_fallthru
      _
    // Predicated region
    $region30: #{location_head_forward.6} parent=1 // pred_check
      _
    $region31: #{location_head_forward.6} parent=1 // pred_check_branch
      %139 = sbr.rel (0) target = $region33
    $region32: #{location_head_forward.6} parent=1 // pred_region
      _
    $region33: #{location_head_forward.6} parent=1 // pred_fallthru
      _
    %140 = vsyncpa [#allocation3], 1
    %141 = vsyncpa [#allocation5], 1

// kernel: location_head_forward.7
$region0: #{location_head_forward.7}
  #allocation0 [shape = 'u32[]', space=smem, size = 0x4, offset = 0x4, fixed_abs, tag = 'smem constant byte address 0x4 - core index']
  #allocation1 [shape = 'u32[144,128]{1,0:T(1,128)}', space=vmem, size = 0x12000, scoped, tag = 'internal scratch']
  %s0 = inlined_call_operand.vmem [shape: bf16[32,144], index: 0, kind: input, shape index: {}]
  %s1 = inlined_call_operand.vmem [shape: bf16[144,128], index: 1, kind: input, shape index: {}]
  %s2 = inlined_call_operand.vmem [shape: f32[32,1], index: 2, kind: input, shape index: {}]
  %s3 = inlined_call_operand.vmem [shape: f32[32,128], index: 3, kind: output, shape index: {}]
  %s4 = sld [smem:[#allocation0]]
  $region22: #{location_head_forward.7} parent=0
    _
  %s6 = ssub.s32 1, %s4
  %s7 = scalar_select 0, %s6, %s4
  // Predicated region
  $region2: #{location_head_forward.7} parent=0 // pred_check
    _
  $region3: #{location_head_forward.7} parent=0 // pred_check_branch
    %9 = sbr.rel (0) target = $region5
  $region4: #{location_head_forward.7} parent=0 // pred_region
    _
  $region5: #{location_head_forward.7} parent=0 // pred_fallthru
    _
  // Predicated region
  $region6: #{location_head_forward.7} parent=0 // pred_check
    _
  $region7: #{location_head_forward.7} parent=0 // pred_check_branch
    %11 = sbr.rel (0) target = $region9
  $region8: #{location_head_forward.7} parent=0 // pred_region
    _
  $region9: #{location_head_forward.7} parent=0 // pred_fallthru
    _
  // Predicated region
  $region10: #{location_head_forward.7} parent=0 // pred_check
    _
  $region11: #{location_head_forward.7} parent=0 // pred_check_branch
    %13 = sbr.rel (0) target = $region13
  $region12: #{location_head_forward.7} parent=0 // pred_region
    _
  $region13: #{location_head_forward.7} parent=0 // pred_fallthru
    _
  %v15 = vld [vmem:[%s0] sm:$0xff]
  %v16 = vld [vmem:[%s0 + $0x8] sm:$0xff]
  %v17 = vld [vmem:[%s0 + $0x10] sm:$0xff]
  %v18 = vld [vmem:[%s0 + $0x18] sm:$0xff]
  %v19 = vld [vmem:[%s1] sm:$0xf]
  %v20 = vld [vmem:[%s1 + $0x4] sm:$0xf]
  %v21 = vld [vmem:[%s1 + $0x8] sm:$0xf]
  %v22 = vld [vmem:[%s1 + $0xc] sm:$0xf]
  %v23 = vld [vmem:[%s1 + $0x10] sm:$0xf]
  %v24 = vld [vmem:[%s1 + $0x14] sm:$0xf]
  %v25 = vld [vmem:[%s1 + $0x18] sm:$0xf]
  %v26 = vld [vmem:[%s1 + $0x1c] sm:$0xf]
  %v27 = vld [vmem:[%s1 + $0x20] sm:$0xf]
  %v28 = vld [vmem:[%s1 + $0x24] sm:$0xf]
  %v29 = vld [vmem:[%s1 + $0x28] sm:$0xf]
  %v30 = vld [vmem:[%s1 + $0x2c] sm:$0xf]
  %v31 = vld [vmem:[%s1 + $0x30] sm:$0xf]
  %v32 = vld [vmem:[%s1 + $0x34] sm:$0xf]
  %v33 = vld [vmem:[%s1 + $0x38] sm:$0xf]
  %v34 = vld [vmem:[%s1 + $0x3c] sm:$0xf]
  %v35 = vld [vmem:[%s1 + $0x40] sm:$0xf]
  %v36 = vld [vmem:[%s1 + $0x44] sm:$0xf]
  %v37 = vld [vmem:[%s2] sm:$0xff]
  %v38 = vld [vmem:[%s2 + $0x8] sm:$0xff]
  %v39 = vld [vmem:[%s2 + $0x10] sm:$0xff]
  %v40 = vld [vmem:[%s2 + $0x18] sm:$0xff]
  %42 = vset.pattern.permute.xlu0 0
  %43 = vperm.xlu0 %42, %v37
  %v44 = vpop.permute.xlu0 %43
  %47 = vset.pattern.permute.xlu0 0
  %48 = vperm.xlu0 %47, %v38
  %v49 = vpop.permute.xlu0 %48
  %52 = vset.pattern.permute.xlu0 0
  %53 = vperm.xlu0 %52, %v39
  %v54 = vpop.permute.xlu0 %53
  %57 = vset.pattern.permute.xlu0 0
  %58 = vperm.xlu0 %57, %v40
  %v59 = vpop.permute.xlu0 %58
  %v65 = vunpack.c.l.b16 %v15
  %v66 = vunpack.c.h.b16 %v15
  %v67 = vunpack.c.l.b16 %v16
  %v68 = vunpack.c.h.b16 %v16
  %v69 = vunpack.c.l.b16 %v17
  %v70 = vunpack.c.h.b16 %v17
  %v71 = vunpack.c.l.b16 %v18
  %v72 = vunpack.c.h.b16 %v18
  %v73 = vpack.c.b16 %v67, %v65
  %v74 = vpack.c.b16 %v68, %v66
  %v75 = vpack.c.b16 %v71, %v69
  %v76 = vpack.c.b16 %v72, %v70
  %v97 = vunpack.c.l.b16 %v19
  %v98 = vunpack.c.l.b16 %v20
  %v99 = vunpack.c.l.b16 %v21
  %v100 = vunpack.c.l.b16 %v22
  %v101 = vunpack.c.l.b16 %v23
  %v102 = vunpack.c.l.b16 %v24
  %v103 = vunpack.c.l.b16 %v25
  %v104 = vunpack.c.l.b16 %v26
  %v105 = vunpack.c.l.b16 %v27
  %v106 = vunpack.c.l.b16 %v28
  %v107 = vunpack.c.l.b16 %v29
  %v108 = vunpack.c.l.b16 %v30
  %v109 = vunpack.c.l.b16 %v31
  %v110 = vunpack.c.l.b16 %v32
  %v111 = vunpack.c.l.b16 %v33
  %v112 = vunpack.c.l.b16 %v34
  %v113 = vunpack.c.l.b16 %v35
  %v114 = vunpack.c.l.b16 %v36
  %v115 = vpack.c.b16 %v98, %v97
  %v116 = vpack.c.b16 %v100, %v99
  %v117 = vpack.c.b16 %v102, %v101
  %v118 = vpack.c.b16 %v104, %v103
  %v119 = vpack.c.b16 %v106, %v105
  %v120 = vpack.c.b16 %v108, %v107
  %v121 = vpack.c.b16 %v110, %v109
  %v122 = vpack.c.b16 %v112, %v111
  %v123 = vpack.c.b16 %v114, %v113
  %vm133 = vcmask 130048
  %v135 = vsel %vm133, %v74, 0
  %v138 = vsel %vm133, %v76, 0
  %140 = vmatprep.subr.bf16.mxu0 0
  %141 = vmatpush1.bf16.msra.mxu0 %v122
  %142 = vmatprep.subr.bf16.mxu0 0
  %143 = vmatpush1.bf16.msra.mxu0 %v121
  %144 = vmatprep.subr.bf16.mxu0 0
  %145 = vmatpush1.bf16.msra.mxu0 %v120
  %146 = vmatprep.subr.bf16.mxu0 0
  %147 = vmatpush1.bf16.msra.mxu0 %v119
  %148 = vmatprep.subr.bf16.mxu0 0
  %149 = vmatpush1.bf16.msra.mxu0 %v118
  %150 = vmatprep.subr.bf16.mxu0 0
  %151 = vmatpush1.bf16.msra.mxu0 %v117
  %152 = vmatprep.subr.bf16.mxu0 0
  %153 = vmatpush1.bf16.msra.mxu0 %v116
  %154 = vmatprep.subr.bf16.mxu0 0
  %155 = vmatpush1.bf16.msra.mxu0 %v115
  %156 = vmatprep.subr.bf16.mxu0 0
  %157 = vmatpush2.bf16.msra.mxu0 0
  %158 = vmatprep.subr.bf16.mxu0 0
  %159 = vmatpush2.bf16.msra.mxu0 0
  %160 = vmatprep.subr.bf16.mxu0 0
  %161 = vmatpush2.bf16.msra.mxu0 0
  %162 = vmatprep.subr.bf16.mxu0 0
  %163 = vmatpush2.bf16.msra.mxu0 0
  %164 = vmatprep.subr.bf16.mxu0 0
  %165 = vmatpush2.bf16.msra.mxu0 0
  %166 = vmatprep.subr.bf16.mxu0 0
  %167 = vmatpush2.bf16.msra.mxu0 0
  %168 = vmatprep.subr.bf16.mxu0 0
  %169 = vmatpush2.bf16.msra.mxu0 0
  %170 = vmatprep.subr.bf16.mxu0 0
  %171 = vmatpush2.bf16.msra.mxu0 %v123
  %172 = vmatprep.mubr.bf16.mxu0 %v135
  %173 = vmatmul.mubr.bf16.gmra.mxu0 %v73
  %v174 = vpop.f32.mrf.mxu0
  %v175 = vadd.f32 %v44, %v174
  %v176 = vpop.f32.mrf.mxu0
  %v177 = vpop.f32.mrf.mxu0
  %v178 = vadd.f32 %v49, %v177
  %v179 = vpop.f32.mrf.mxu0
  %180 = vmatprep.mubr.bf16.mxu0 %v138
  %181 = vmatmul.mubr.bf16.gmra.mxu0 %v75
  %v182 = vpop.f32.mrf.mxu0
  %v183 = vadd.f32 %v54, %v182
  %v184 = vpop.f32.mrf.mxu0
  %v185 = vpop.f32.mrf.mxu0
  %v186 = vadd.f32 %v59, %v185
  %v187 = vpop.f32.mrf.mxu0
  %188 = vdwg.mxu0
  %v189 = vmax.f32 %v175, 0.0
  %v190 = vmax.f32 %v178, 0.0
  %v191 = vmax.f32 %v183, 0.0
  %v192 = vmax.f32 %v186, 0.0
  %193 = vst [vmem:[%s3] sm:$0xff] %v189
  %194 = vst [vmem:[%s3 + $0x8] sm:$0xff] %v190
  %195 = vst [vmem:[%s3 + $0x10] sm:$0xff] %v191
  %196 = vst [vmem:[%s3 + $0x18] sm:$0xff] %v192
  // Predicated region
  $region14: #{location_head_forward.7} parent=0 // pred_check
    _
  $region15: #{location_head_forward.7} parent=0 // pred_check_branch
    %198 = sbr.rel (0) target = $region17
  $region16: #{location_head_forward.7} parent=0 // pred_region
    _
  $region17: #{location_head_forward.7} parent=0 // pred_fallthru
    _
  // Predicated region
  $region18: #{location_head_forward.7} parent=0 // pred_check
    _
  $region19: #{location_head_forward.7} parent=0 // pred_check_branch
    %200 = sbr.rel (0) target = $region21
  $region20: #{location_head_forward.7} parent=0 // pred_region
    _
  $region21: #{location_head_forward.7} parent=0 // pred_fallthru
    _

// kernel: location_head_forward.8
$region0: #{location_head_forward.8}
  #allocation0 [shape = 'u32[]', space=smem, size = 0x4, offset = 0x4, fixed_abs, tag = 'smem constant byte address 0x4 - core index']
  #allocation1 [shape = 'u32[144,128]{1,0:T(1,128)}', space=vmem, size = 0x12000, scoped, tag = 'internal scratch']
  %s0 = inlined_call_operand.vmem [shape: bf16[8,72], index: 0, kind: input, shape index: {}]
  %s1 = inlined_call_operand.vmem [shape: bf16[72,512], index: 1, kind: input, shape index: {}]
  %s2 = inlined_call_operand.vmem [shape: f32[8,1], index: 2, kind: input, shape index: {}]
  %s3 = inlined_call_operand.vmem [shape: f32[8,512], index: 3, kind: output, shape index: {}]
  %s4 = sld [smem:[#allocation0]]
  $region83: #{location_head_forward.8} parent=0
    _
  %s6 = ssub.s32 1, %s4
  %s7 = scalar_select 0, %s6, %s4
  $region1: #{location_head_forward.8} parent=0
    #allocation2 [shape = 'u8[73728]{0}', space=vmem, size = 0x12000, scoped, tag = 'input window, operand 1']
    loop: start=0, step=1, limit=4
    $region2: #{location_head_forward.8} parent=1 // loop_pre_header
      _
    $region3: #{location_head_forward.8} parent=1 // loop_header
      %s9 = sphi 0, %s13
      %p10 = scmp.ge.s32.totalorder %s9, 4
      %s17 = sphi 0, %s17
      %s19 = sphi 0, %s17
      %s20 = sphi 0, %s19
      %s34 = sphi 0, %s20
      %s40 = sphi 0, %s42
      %s43 = sphi 0, %s40
      %s44 = sphi 0, %s43
      %s60 = sphi 0, %s44
      %s64 = sphi 0, %s64
      %s66 = sphi 0, %s64
      %s67 = sphi 0, %s66
      %s81 = sphi 0, %s67
      %s87 = sphi 0, %s89
      %s90 = sphi 0, %s87
      %s91 = sphi 0, %s90
      %s107 = sphi 0, %s91
    $region4: #{location_head_forward.8} parent=1 // loop_header_branch
      %12 = sbr.rel (%p10) target = $region8
    $region5: #{location_head_forward.8} parent=1 // loop_body
      %s14 = ssub.s32 %s9, 1
      %s15 = ssub.s32 %s9, 2
      %s16 = sadd.s32 %s9, 1
      %s18 = sadd.s32 %s17, 1
      %p21 = scmp.eq.s32.totalorder %s9, 1
      %p22 = scmp.ne.s32.totalorder %s17, %s19
      %p23 = scmp.eq.s32.totalorder %s9, 0
      %p24 = por %p22, %p23
      %p25 = scmp.ne.s32.totalorder %s17, %s19
      %p26 = scmp.eq.s32.totalorder %s14, 1
      %p27 = por %p25, %p26
      %p28 = scmp.ne.s32.totalorder %s19, %s20
      %p29 = scmp.eq.s32.totalorder %s14, 0
      %p30 = por %p28, %p29
      %p31 = scmp.ne.s32.totalorder %s19, %s20
      %p32 = scmp.eq.s32.totalorder %s15, 1
      %p33 = por %p31, %p32
      %p35 = scmp.ne.s32.totalorder %s20, %s34
      %p36 = scmp.eq.s32.totalorder %s15, 0
      %p37 = por %p35, %p36
      %s38 = ssub.s32 %s9, %s16
      %p39 = scmp.eq.s32.totalorder %s38, 0
      %s41 = sadd.s32 %s40, 1
      %s42 = scalar_select %p39, %s40, %s41
      %p45 = pneg %p39
      %p46 = scmp.eq.s32.totalorder %s9, 1
      %p47 = por %p45, %p46
      %p48 = scmp.ne.s32.totalorder %s40, %s43
      %p49 = scmp.eq.s32.totalorder %s9, 0
      %p50 = por %p48, %p49
      %p51 = scmp.ne.s32.totalorder %s40, %s43
      %p52 = scmp.eq.s32.totalorder %s14, 1
      %p53 = por %p51, %p52
      %p54 = scmp.ne.s32.totalorder %s43, %s44
      %p55 = scmp.eq.s32.totalorder %s14, 0
      %p56 = por %p54, %p55
      %p57 = scmp.ne.s32.totalorder %s43, %s44
      %p58 = scmp.eq.s32.totalorder %s15, 1
      %p59 = por %p57, %p58
      %p61 = scmp.ne.s32.totalorder %s44, %s60
      %p62 = scmp.eq.s32.totalorder %s15, 0
      %p63 = por %p61, %p62
      %s65 = sadd.s32 %s64, 1
      %p68 = scmp.eq.s32.totalorder %s9, 1
      %p69 = scmp.ne.s32.totalorder %s64, %s66
      %p70 = scmp.eq.s32.totalorder %s9, 0
      %p71 = por %p69, %p70
      %p72 = scmp.ne.s32.totalorder %s64, %s66
      %p73 = scmp.eq.s32.totalorder %s14, 1
      %p74 = por %p72, %p73
      %p75 = scmp.ne.s32.totalorder %s66, %s67
      %p76 = scmp.eq.s32.totalorder %s14, 0
      %p77 = por %p75, %p76
      %p78 = scmp.ne.s32.totalorder %s66, %s67
      %p79 = scmp.eq.s32.totalorder %s15, 1
      %p80 = por %p78, %p79
      %p82 = scmp.ne.s32.totalorder %s67, %s81
      %p83 = scmp.eq.s32.totalorder %s15, 0
      %p84 = por %p82, %p83
      %s85 = ssub.s32 %s9, %s16
      %p86 = scmp.eq.s32.totalorder %s85, 0
      %s88 = sadd.s32 %s87, 1
      %s89 = scalar_select %p86, %s87, %s88
      %p92 = pneg %p86
      %p93 = scmp.eq.s32.totalorder %s9, 1
      %p94 = por %p92, %p93
      %p95 = scmp.ne.s32.totalorder %s87, %s90
      %p96 = scmp.eq.s32.totalorder %s9, 0
      %p97 = por %p95, %p96
      %p98 = scmp.ne.s32.totalorder %s87, %s90
      %p99 = scmp.eq.s32.totalorder %s14, 1
      %p100 = por %p98, %p99
      %p101 = scmp.ne.s32.totalorder %s90, %s91
      %p102 = scmp.eq.s32.totalorder %s14, 0
      %p103 = por %p101, %p102
      %p104 = scmp.ne.s32.totalorder %s90, %s91
      %p105 = scmp.eq.s32.totalorder %s15, 1
      %p106 = por %p104, %p105
      %p108 = scmp.ne.s32.totalorder %s91, %s107
      %p109 = scmp.eq.s32.totalorder %s15, 0
      %p110 = por %p108, %p109
      %p111 = scmp.le.s32.totalorder 1, %s9
      %p112 = scmp.lt.s32.totalorder %s9, 3
      %p113 = pnand %p111, %p112
      %p114 = pneg %p113
      // Predicated region
      $region9: #{location_head_forward.8} parent=5 // pred_check
        _
      $region10: #{location_head_forward.8} parent=5 // pred_check_branch
        %116 = sbr.rel (%p113) target = $region12
      $region11: #{location_head_forward.8} parent=5 // pred_region
        %s117 = ssub.s32 %s9, 1
        // Predicated region
        $region13: #{location_head_forward.8} parent=11 // pred_check
          %p118 = pneg %p30
        $region14: #{location_head_forward.8} parent=11 // pred_check_branch
          %120 = sbr.rel (%p118) target = $region16
        $region15: #{location_head_forward.8} parent=11 // pred_region
          _
        $region16: #{location_head_forward.8} parent=11 // pred_fallthru
          _
        // Predicated region
        $region17: #{location_head_forward.8} parent=11 // pred_check
          %p121 = pneg %p77
        $region18: #{location_head_forward.8} parent=11 // pred_check_branch
          %123 = sbr.rel (%p121) target = $region20
        $region19: #{location_head_forward.8} parent=11 // pred_region
          _
        $region20: #{location_head_forward.8} parent=11 // pred_fallthru
          _
      $region12: #{location_head_forward.8} parent=5 // pred_fallthru
        _
      %p124 = scmp.lt.s32.totalorder %s9, 2
      // Predicated region
      $region21: #{location_head_forward.8} parent=5 // pred_check
        %p125 = pneg %p124
      $region22: #{location_head_forward.8} parent=5 // pred_check_branch
        %127 = sbr.rel (%p125) target = $region24
      $region23: #{location_head_forward.8} parent=5 // pred_region
        // Predicated region
        $region25: #{location_head_forward.8} parent=23 // pred_check
          %p128 = pneg %p50
        $region26: #{location_head_forward.8} parent=23 // pred_check_branch
          %130 = sbr.rel (%p128) target = $region28
        $region27: #{location_head_forward.8} parent=23 // pred_region
          %s131 = sand.u32 %s40, 1
          %s132 = sand.u32 %s40, 1
          %s133 = smul.addr %s132, 72
          %s134 = scalar_lea.vmem [#allocation2], %s133
          %s135 = smul.u32 2, %s9
          %s136 = smul.addr %s135, 4
          %s137 = scalar_lea.vmem %s1, %s136
          // Predicated region
          $region29: #{location_head_forward.8} parent=27 // pred_check
            _
          $region30: #{location_head_forward.8} parent=27 // pred_check_branch
            %139 = sbr.rel (0) target = $region32
          $region31: #{location_head_forward.8} parent=27 // pred_region
            // Predicated region
            $region33: #{location_head_forward.8} parent=31 // pred_check
              _
            $region34: #{location_head_forward.8} parent=31 // pred_check_branch
              %141 = sbr.rel (0) target = $region36
            $region35: #{location_head_forward.8} parent=31 // pred_region
              // Predicated region
              $region48: #{location_head_forward.8} parent=35 // pred_check
                _
              $region49: #{location_head_forward.8} parent=35 // pred_check_branch
                %173 = sbr.rel (0) target = $region51
              $region50: #{location_head_forward.8} parent=35 // pred_region
                loop: start=0, step=1, limit=1
                $region52: #{location_head_forward.8} parent=50 // loop_pre_header
                  _
                $region53: #{location_head_forward.8} parent=50 // loop_header
                  %s175 = sphi 0, %s179
                  %p176 = scmp.ge.s32.totalorder %s175, 1
                  %s180 = sphi %s137, %s137
                  %s181 = sphi %s134, %s134
                $region54: #{location_head_forward.8} parent=50 // loop_header_branch
                  %178 = sbr.rel (%p176) target = $region58
                $region55: #{location_head_forward.8} parent=50 // loop_body
                  %v182 = vld [vmem:[%s180] sm:$0xff]
                  %183 = vst [vmem:[%s181] sm:$0xff] %v182
                  %v184 = vld [vmem:[%s180 + $0x10] sm:$0xff]
                  %185 = vst [vmem:[%s181 + $0x8] sm:$0xff] %v184
                  %v186 = vld [vmem:[%s180 + $0x20] sm:$0xff]
                  %187 = vst [vmem:[%s181 + $0x10] sm:$0xff] %v186
                  %v188 = vld [vmem:[%s180 + $0x30] sm:$0xff]
                  %189 = vst [vmem:[%s181 + $0x18] sm:$0xff] %v188
                  %v190 = vld [vmem:[%s180 + $0x40] sm:$0xff]
                  %191 = vst [vmem:[%s181 + $0x20] sm:$0xff] %v190
                  %v192 = vld [vmem:[%s180 + $0x50] sm:$0xff]
                  %193 = vst [vmem:[%s181 + $0x28] sm:$0xff] %v192
                  %v194 = vld [vmem:[%s180 + $0x60] sm:$0xff]
                  %195 = vst [vmem:[%s181 + $0x30] sm:$0xff] %v194
                  %v196 = vld [vmem:[%s180 + $0x70] sm:$0xff]
                  %197 = vst [vmem:[%s181 + $0x38] sm:$0xff] %v196
                  %v198 = vld [vmem:[%s180 + $0x80] sm:$0xff]
                  %199 = vst [vmem:[%s181 + $0x40] sm:$0xff] %v198
                $region56: #{location_head_forward.8} parent=50 // loop_footer
                  %s179 = sadd.s32 1, %s175
                $region57: #{location_head_forward.8} parent=50 // loop_footer_branch
                  %174 = sbr.rel target = $region53
                $region58: #{location_head_forward.8} parent=50 // loop_exit
                  _
              $region51: #{location_head_forward.8} parent=35 // pred_fallthru
                _
              // Predicated region
              $region59: #{location_head_forward.8} parent=35 // pred_check
                _
              $region60: #{location_head_forward.8} parent=35 // pred_check_branch
                %201 = sbr.rel target = $region62
              $region61: #{location_head_forward.8} parent=35 // pred_region
                _
              $region62: #{location_head_forward.8} parent=35 // pred_fallthru
                _
            $region36: #{location_head_forward.8} parent=31 // pred_fallthru
              _
            // Predicated region
            $region37: #{location_head_forward.8} parent=31 // pred_check
              _
            $region38: #{location_head_forward.8} parent=31 // pred_check_branch
              %143 = sbr.rel target = $region40
            $region39: #{location_head_forward.8} parent=31 // pred_region
              %s145 = ssub.s32 256, 1
              loop: start=0, step=1, limit=1
              $region41: #{location_head_forward.8} parent=39 // loop_pre_header
                _
              $region42: #{location_head_forward.8} parent=39 // loop_header
                %s147 = sphi 0, %s151
                %p148 = scmp.ge.s32.totalorder %s147, 1
                %s152 = sphi %s137, %s137
                %s153 = sphi %s134, %s134
              $region43: #{location_head_forward.8} parent=39 // loop_header_branch
                %150 = sbr.rel (%p148) target = $region47
              $region44: #{location_head_forward.8} parent=39 // loop_body
                %v154 = vld [vmem:[%s152] sm:%s145]
                %155 = vst [vmem:[%s153] sm:%s145] %v154
                %v156 = vld [vmem:[%s152 + $0x10] sm:%s145]
                %157 = vst [vmem:[%s153 + $0x8] sm:%s145] %v156
                %v158 = vld [vmem:[%s152 + $0x20] sm:%s145]
                %159 = vst [vmem:[%s153 + $0x10] sm:%s145] %v158
                %v160 = vld [vmem:[%s152 + $0x30] sm:%s145]
                %161 = vst [vmem:[%s153 + $0x18] sm:%s145] %v160
                %v162 = vld [vmem:[%s152 + $0x40] sm:%s145]
                %163 = vst [vmem:[%s153 + $0x20] sm:%s145] %v162
                %v164 = vld [vmem:[%s152 + $0x50] sm:%s145]
                %165 = vst [vmem:[%s153 + $0x28] sm:%s145] %v164
                %v166 = vld [vmem:[%s152 + $0x60] sm:%s145]
                %167 = vst [vmem:[%s153 + $0x30] sm:%s145] %v166
                %v168 = vld [vmem:[%s152 + $0x70] sm:%s145]
                %169 = vst [vmem:[%s153 + $0x38] sm:%s145] %v168
                %v170 = vld [vmem:[%s152 + $0x80] sm:%s145]
                %171 = vst [vmem:[%s153 + $0x40] sm:%s145] %v170
              $region45: #{location_head_forward.8} parent=39 // loop_footer
                %s151 = sadd.s32 1, %s147
              $region46: #{location_head_forward.8} parent=39 // loop_footer_branch
                %146 = sbr.rel target = $region42
              $region47: #{location_head_forward.8} parent=39 // loop_exit
                _
            $region40: #{location_head_forward.8} parent=31 // pred_fallthru
              _
          $region32: #{location_head_forward.8} parent=27 // pred_fallthru
            _
          %202 = vnop
        $region28: #{location_head_forward.8} parent=23 // pred_fallthru
          _
      $region24: #{location_head_forward.8} parent=5 // pred_fallthru
        _
      %p203 = scmp.le.s32.totalorder 1, %s9
      %p204 = scmp.lt.s32.totalorder %s9, 3
      %p205 = pnand %p203, %p204
      %p206 = pneg %p205
      // Predicated region
      $region63: #{location_head_forward.8} parent=5 // pred_check
        _
      $region64: #{location_head_forward.8} parent=5 // pred_check_branch
        %208 = sbr.rel (%p205) target = $region66
      $region65: #{location_head_forward.8} parent=5 // pred_region
        %s209 = ssub.s32 %s9, 1
        %s210 = sand.u32 %s43, 1
        %s211 = sand.u32 %s43, 1
        %s212 = smul.addr %s211, 72
        %s213 = scalar_lea.vmem [#allocation2], %s212
        // Predicated region
        $region67: #{location_head_forward.8} parent=65 // pred_check
          %p214 = pneg %p56
        $region68: #{location_head_forward.8} parent=65 // pred_check_branch
          %216 = sbr.rel (%p214) target = $region70
        $region69: #{location_head_forward.8} parent=65 // pred_region
          _
        $region70: #{location_head_forward.8} parent=65 // pred_fallthru
          _
        %p217 = pneg %p30
        %p218 = pneg %p27
        %s219 = sand.u32 %s43, 1
        %s220 = sand.u32 %s43, 1
        %s221 = smul.addr %s220, 72
        %s222 = scalar_lea.vmem [#allocation2], %s221
        %p223 = pneg %p56
        %p224 = pneg %p53
        %p225 = pneg %p77
        %p226 = pneg %p74
        %p227 = pneg %p103
        %p228 = pneg %p100
        %s229 = smul.u32 2, %s14
        %p230 = scmp.lt.s32.totalorder %s229, 3
        %s231 = scalar_select %p230, %s229, 3
        %s232 = smul.addr %s231, 8
        %s233 = scalar_lea.vmem %s3, %s232
        %s234 = smul.u32 2, %s14
        %s235 = smul.u32 2, %s14
        %p236 = scmp.lt.s32.totalorder %s235, 3
        %s237 = scalar_select %p236, %s235, 3
        %s238 = smul.addr %s237, 8
        %s239 = scalar_lea.vmem %s3, %s238
        %s240 = smul.u32 2, %s14
        %v242 = vld [vmem:[%s0] sm:$0xf]
        %v243 = vld [vmem:[%s213] sm:$0xff]
        %v244 = vld [vmem:[%s213 + $0x8] sm:$0xff]
        %v245 = vld [vmem:[%s213 + $0x10] sm:$0xff]
        %v246 = vld [vmem:[%s213 + $0x18] sm:$0xff]
        %v247 = vld [vmem:[%s213 + $0x20] sm:$0xff]
        %v248 = vld [vmem:[%s213 + $0x28] sm:$0xff]
        %v249 = vld [vmem:[%s213 + $0x30] sm:$0xff]
        %v250 = vld [vmem:[%s213 + $0x38] sm:$0xff]
        %v251 = vld [vmem:[%s213 + $0x40] sm:$0xff]
        %v252 = vld [vmem:[%s2] sm:$0xff]
        %254 = vset.pattern.permute.xlu0 0
        %255 = vperm.xlu0 %254, %v252
        %v256 = vpop.permute.xlu0 %255
        %v267 = vunpack.c.l.b16 %v243
        %v268 = vunpack.c.h.b16 %v243
        %v269 = vunpack.c.l.b16 %v244
        %v270 = vunpack.c.h.b16 %v244
        %v271 = vunpack.c.l.b16 %v245
        %v272 = vunpack.c.h.b16 %v245
        %v273 = vunpack.c.l.b16 %v246
        %v274 = vunpack.c.h.b16 %v246
        %v275 = vunpack.c.l.b16 %v247
        %v276 = vunpack.c.h.b16 %v247
        %v277 = vunpack.c.l.b16 %v248
        %v278 = vunpack.c.h.b16 %v248
        %v279 = vunpack.c.l.b16 %v249
        %v280 = vunpack.c.h.b16 %v249
        %v281 = vunpack.c.l.b16 %v250
        %v282 = vunpack.c.h.b16 %v250
        %v283 = vunpack.c.l.b16 %v251
        %v284 = vunpack.c.h.b16 %v251
        %v285 = vpack.c.b16 %v269, %v267
        %v286 = vpack.c.b16 %v270, %v268
        %v287 = vpack.c.b16 %v273, %v271
        %v288 = vpack.c.b16 %v274, %v272
        %v289 = vpack.c.b16 %v277, %v275
        %v290 = vpack.c.b16 %v278, %v276
        %v291 = vpack.c.b16 %v281, %v279
        %v292 = vpack.c.b16 %v282, %v280
        %v293 = vpack.c.b16 %v283, %v283
        %v294 = vpack.c.b16 %v284, %v284
        %vm303 = vcmask 588800
        %v305 = vsel %vm303, %v242, 0
        %vm307 = vcmask 1043456
        %v309 = vsel %vm307, %v293, 0
        %v312 = vsel %vm307, %v294, 0
        %314 = vmatprep.subr.bf16.mxu0 0
        %315 = vmatpush1.bf16.msra.mxu0 0
        %316 = vmatprep.subr.bf16.mxu0 0
        %317 = vmatpush1.bf16.msra.mxu0 0
        %318 = vmatprep.subr.bf16.mxu0 0
        %319 = vmatpush1.bf16.msra.mxu0 0
        %320 = vmatprep.subr.bf16.mxu0 %v312
        %321 = vmatpush1.bf16.msra.mxu0 %v309
        %322 = vmatprep.subr.bf16.mxu0 %v292
        %323 = vmatpush1.bf16.msra.mxu0 %v291
        %324 = vmatprep.subr.bf16.mxu0 %v290
        %325 = vmatpush1.bf16.msra.mxu0 %v289
        %326 = vmatprep.subr.bf16.mxu0 %v288
        %327 = vmatpush1.bf16.msra.mxu0 %v287
        %328 = vmatprep.subr.bf16.mxu0 %v286
        %329 = vmatpush1.bf16.msra.mxu0 %v285
        %330 = vmatprep.subr.bf16.mxu0 0
        %331 = vmatpush2.bf16.msra.mxu0 0
        %332 = vmatprep.subr.bf16.mxu0 0
        %333 = vmatpush2.bf16.msra.mxu0 0
        %334 = vmatprep.subr.bf16.mxu0 0
        %335 = vmatpush2.bf16.msra.mxu0 0
        %336 = vmatprep.subr.bf16.mxu0 0
        %337 = vmatpush2.bf16.msra.mxu0 0
        %338 = vmatprep.subr.bf16.mxu0 0
        %339 = vmatpush2.bf16.msra.mxu0 0
        %340 = vmatprep.subr.bf16.mxu0 0
        %341 = vmatpush2.bf16.msra.mxu0 0
        %342 = vmatprep.subr.bf16.mxu0 0
        %343 = vmatpush2.bf16.msra.mxu0 0
        %344 = vmatprep.subr.bf16.mxu0 0
        %345 = vmatpush2.bf16.msra.mxu0 0
        %346 = vmatprep.mubr.bf16.mxu0 0
        %347 = vmatmul.mubr.bf16.gmra.mxu0 %v305
        %v348 = vpop.f32.mrf.mxu0
        %v349 = vadd.f32 %v256, %v348
        %v350 = vpop.f32.mrf.mxu0
        %v351 = vadd.f32 %v256, %v350
        %v352 = vpop.f32.mrf.mxu0
        %v353 = vpop.f32.mrf.mxu0
        %354 = vdwg.mxu0
        %v355 = vmax.f32 %v349, 0.0
        %v356 = vmax.f32 %v351, 0.0
        %357 = vst [vmem:[%s239] sm:$0xff] %v355
        %358 = vst [vmem:[%s239 + $0x8] sm:$0xff] %v356
        %s359 = smul.u32 2, %s14
        %p360 = scmp.lt.s32.totalorder %s359, 3
        %s361 = scalar_select %p360, %s359, 3
        %s362 = smul.addr %s361, 8
        %s363 = scalar_lea.vmem %s3, %s362
        // Predicated region
        $region71: #{location_head_forward.8} parent=65 // pred_check
          %p364 = pneg %p100
        $region72: #{location_head_forward.8} parent=65 // pred_check_branch
          %366 = sbr.rel (%p364) target = $region74
        $region73: #{location_head_forward.8} parent=65 // pred_region
          %s367 = smul.u32 2, %s14
        $region74: #{location_head_forward.8} parent=65 // pred_fallthru
          _
      $region66: #{location_head_forward.8} parent=5 // pred_fallthru
        _
      %p368 = scmp.le.s32.totalorder 2, %s9
      // Predicated region
      $region75: #{location_head_forward.8} parent=5 // pred_check
        %p369 = pneg %p368
      $region76: #{location_head_forward.8} parent=5 // pred_check_branch
        %371 = sbr.rel (%p369) target = $region78
      $region77: #{location_head_forward.8} parent=5 // pred_region
        %s372 = ssub.s32 %s9, 2
        // Predicated region
        $region79: #{location_head_forward.8} parent=77 // pred_check
          %p373 = pneg %p106
        $region80: #{location_head_forward.8} parent=77 // pred_check_branch
          %375 = sbr.rel (%p373) target = $region82
        $region81: #{location_head_forward.8} parent=77 // pred_region
          %s376 = smul.u32 2, %s15
          %p377 = scmp.lt.s32.totalorder %s376, 3
          %s378 = scalar_select %p377, %s376, 3
          %s379 = smul.addr %s378, 8
          %s380 = scalar_lea.vmem %s3, %s379
        $region82: #{location_head_forward.8} parent=77 // pred_fallthru
          _
      $region78: #{location_head_forward.8} parent=5 // pred_fallthru
        _
    $region6: #{location_head_forward.8} parent=1 // loop_footer
      %s13 = sadd.s32 1, %s9
    $region7: #{location_head_forward.8} parent=1 // loop_footer_branch
      %8 = sbr.rel target = $region3
    $region8: #{location_head_forward.8} parent=1 // loop_exit
      _

// kernel: location_head_forward.9
$region0: #{location_head_forward.9}
  #allocation0 [shape = 'u32[]', space=smem, size = 0x4, offset = 0x4, fixed_abs, tag = 'smem constant byte address 0x4 - core index']
  #allocation1 [shape = 'u32[144,128]{1,0:T(1,128)}', space=vmem, size = 0x12000, scoped, tag = 'internal scratch']
  %s0 = inlined_call_operand.vmem [shape: bf16[4,18], index: 0, kind: input, shape index: {}]
  %s1 = inlined_call_operand.vmem [shape: bf16[18,2048], index: 1, kind: input, shape index: {}]
  %s2 = inlined_call_operand.vmem [shape: f32[4,1], index: 2, kind: input, shape index: {}]
  %s3 = inlined_call_operand.vmem [shape: f32[4,2048], index: 3, kind: output, shape index: {}]
  %s4 = sld [smem:[#allocation0]]
  $region68: #{location_head_forward.9} parent=0
    _
  %s6 = ssub.s32 1, %s4
  %s7 = scalar_select 0, %s6, %s4
  $region1: #{location_head_forward.9} parent=0
    #allocation2 [shape = 'u8[98304]{0}', space=vmem, size = 0x18000, scoped, tag = 'input window, operand 1']
    loop: start=0, step=1, limit=4
    $region2: #{location_head_forward.9} parent=1 // loop_pre_header
      _
    $region3: #{location_head_forward.9} parent=1 // loop_header
      %s9 = sphi 0, %s13
      %p10 = scmp.ge.s32.totalorder %s9, 4
      %s17 = sphi 0, %s17
      %s19 = sphi 0, %s17
      %s20 = sphi 0, %s19
      %s34 = sphi 0, %s20
      %s40 = sphi 0, %s42
      %s43 = sphi 0, %s40
      %s44 = sphi 0, %s43
      %s60 = sphi 0, %s44
      %s64 = sphi 0, %s64
      %s66 = sphi 0, %s64
      %s67 = sphi 0, %s66
      %s81 = sphi 0, %s67
      %s87 = sphi 0, %s89
      %s90 = sphi 0, %s87
      %s91 = sphi 0, %s90
      %s107 = sphi 0, %s91
    $region4: #{location_head_forward.9} parent=1 // loop_header_branch
      %12 = sbr.rel (%p10) target = $region8
    $region5: #{location_head_forward.9} parent=1 // loop_body
      %s14 = ssub.s32 %s9, 1
      %s15 = ssub.s32 %s9, 2
      %s16 = sadd.s32 %s9, 1
      %s18 = sadd.s32 %s17, 1
      %p21 = scmp.eq.s32.totalorder %s9, 1
      %p22 = scmp.ne.s32.totalorder %s17, %s19
      %p23 = scmp.eq.s32.totalorder %s9, 0
      %p24 = por %p22, %p23
      %p25 = scmp.ne.s32.totalorder %s17, %s19
      %p26 = scmp.eq.s32.totalorder %s14, 1
      %p27 = por %p25, %p26
      %p28 = scmp.ne.s32.totalorder %s19, %s20
      %p29 = scmp.eq.s32.totalorder %s14, 0
      %p30 = por %p28, %p29
      %p31 = scmp.ne.s32.totalorder %s19, %s20
      %p32 = scmp.eq.s32.totalorder %s15, 1
      %p33 = por %p31, %p32
      %p35 = scmp.ne.s32.totalorder %s20, %s34
      %p36 = scmp.eq.s32.totalorder %s15, 0
      %p37 = por %p35, %p36
      %s38 = ssub.s32 %s9, %s16
      %p39 = scmp.eq.s32.totalorder %s38, 0
      %s41 = sadd.s32 %s40, 1
      %s42 = scalar_select %p39, %s40, %s41
      %p45 = pneg %p39
      %p46 = scmp.eq.s32.totalorder %s9, 1
      %p47 = por %p45, %p46
      %p48 = scmp.ne.s32.totalorder %s40, %s43
      %p49 = scmp.eq.s32.totalorder %s9, 0
      %p50 = por %p48, %p49
      %p51 = scmp.ne.s32.totalorder %s40, %s43
      %p52 = scmp.eq.s32.totalorder %s14, 1
      %p53 = por %p51, %p52
      %p54 = scmp.ne.s32.totalorder %s43, %s44
      %p55 = scmp.eq.s32.totalorder %s14, 0
      %p56 = por %p54, %p55
      %p57 = scmp.ne.s32.totalorder %s43, %s44
      %p58 = scmp.eq.s32.totalorder %s15, 1
      %p59 = por %p57, %p58
      %p61 = scmp.ne.s32.totalorder %s44, %s60
      %p62 = scmp.eq.s32.totalorder %s15, 0
      %p63 = por %p61, %p62
      %s65 = sadd.s32 %s64, 1
      %p68 = scmp.eq.s32.totalorder %s9, 1
      %p69 = scmp.ne.s32.totalorder %s64, %s66
      %p70 = scmp.eq.s32.totalorder %s9, 0
      %p71 = por %p69, %p70
      %p72 = scmp.ne.s32.totalorder %s64, %s66
      %p73 = scmp.eq.s32.totalorder %s14, 1
      %p74 = por %p72, %p73
      %p75 = scmp.ne.s32.totalorder %s66, %s67
      %p76 = scmp.eq.s32.totalorder %s14, 0
      %p77 = por %p75, %p76
      %p78 = scmp.ne.s32.totalorder %s66, %s67
      %p79 = scmp.eq.s32.totalorder %s15, 1
      %p80 = por %p78, %p79
      %p82 = scmp.ne.s32.totalorder %s67, %s81
      %p83 = scmp.eq.s32.totalorder %s15, 0
      %p84 = por %p82, %p83
      %s85 = ssub.s32 %s9, %s16
      %p86 = scmp.eq.s32.totalorder %s85, 0
      %s88 = sadd.s32 %s87, 1
      %s89 = scalar_select %p86, %s87, %s88
      %p92 = pneg %p86
      %p93 = scmp.eq.s32.totalorder %s9, 1
      %p94 = por %p92, %p93
      %p95 = scmp.ne.s32.totalorder %s87, %s90
      %p96 = scmp.eq.s32.totalorder %s9, 0
      %p97 = por %p95, %p96
      %p98 = scmp.ne.s32.totalorder %s87, %s90
      %p99 = scmp.eq.s32.totalorder %s14, 1
      %p100 = por %p98, %p99
      %p101 = scmp.ne.s32.totalorder %s90, %s91
      %p102 = scmp.eq.s32.totalorder %s14, 0
      %p103 = por %p101, %p102
      %p104 = scmp.ne.s32.totalorder %s90, %s91
      %p105 = scmp.eq.s32.totalorder %s15, 1
      %p106 = por %p104, %p105
      %p108 = scmp.ne.s32.totalorder %s91, %s107
      %p109 = scmp.eq.s32.totalorder %s15, 0
      %p110 = por %p108, %p109
      %p111 = scmp.le.s32.totalorder 1, %s9
      %p112 = scmp.lt.s32.totalorder %s9, 3
      %p113 = pnand %p111, %p112
      %p114 = pneg %p113
      // Predicated region
      $region9: #{location_head_forward.9} parent=5 // pred_check
        _
      $region10: #{location_head_forward.9} parent=5 // pred_check_branch
        %116 = sbr.rel (%p113) target = $region12
      $region11: #{location_head_forward.9} parent=5 // pred_region
        %s117 = ssub.s32 %s9, 1
        // Predicated region
        $region13: #{location_head_forward.9} parent=11 // pred_check
          %p118 = pneg %p30
        $region14: #{location_head_forward.9} parent=11 // pred_check_branch
          %120 = sbr.rel (%p118) target = $region16
        $region15: #{location_head_forward.9} parent=11 // pred_region
          _
        $region16: #{location_head_forward.9} parent=11 // pred_fallthru
          _
        // Predicated region
        $region17: #{location_head_forward.9} parent=11 // pred_check
          %p121 = pneg %p77
        $region18: #{location_head_forward.9} parent=11 // pred_check_branch
          %123 = sbr.rel (%p121) target = $region20
        $region19: #{location_head_forward.9} parent=11 // pred_region
          _
        $region20: #{location_head_forward.9} parent=11 // pred_fallthru
          _
      $region12: #{location_head_forward.9} parent=5 // pred_fallthru
        _
      %p124 = scmp.lt.s32.totalorder %s9, 2
      // Predicated region
      $region21: #{location_head_forward.9} parent=5 // pred_check
        %p125 = pneg %p124
      $region22: #{location_head_forward.9} parent=5 // pred_check_branch
        %127 = sbr.rel (%p125) target = $region24
      $region23: #{location_head_forward.9} parent=5 // pred_region
        // Predicated region
        $region25: #{location_head_forward.9} parent=23 // pred_check
          %p128 = pneg %p50
        $region26: #{location_head_forward.9} parent=23 // pred_check_branch
          %130 = sbr.rel (%p128) target = $region28
        $region27: #{location_head_forward.9} parent=23 // pred_region
          %s131 = sand.u32 %s40, 1
          %s132 = sand.u32 %s40, 1
          %s133 = smul.addr %s132, 96
          %s134 = scalar_lea.vmem [#allocation2], %s133
          %s135 = smul.u32 8, %s9
          %s136 = smul.addr %s135, 4
          %s137 = scalar_lea.vmem %s1, %s136
          // Predicated region
          $region29: #{location_head_forward.9} parent=27 // pred_check
            _
          $region30: #{location_head_forward.9} parent=27 // pred_check_branch
            %139 = sbr.rel (0) target = $region32
          $region31: #{location_head_forward.9} parent=27 // pred_region
            // Predicated region
            $region33: #{location_head_forward.9} parent=31 // pred_check
              _
            $region34: #{location_head_forward.9} parent=31 // pred_check_branch
              %141 = sbr.rel (0) target = $region36
            $region35: #{location_head_forward.9} parent=31 // pred_region
              loop: start=0, step=1, limit=1
              $region37: #{location_head_forward.9} parent=35 // loop_pre_header
                _
              $region38: #{location_head_forward.9} parent=35 // loop_header
                %s143 = sphi 0, %s147
                %p144 = scmp.ge.s32.totalorder %s143, 1
                %s148 = sphi %s137, %s137
                %s149 = sphi %s134, %s134
              $region39: #{location_head_forward.9} parent=35 // loop_header_branch
                %146 = sbr.rel (%p144) target = $region43
              $region40: #{location_head_forward.9} parent=35 // loop_body
                %v150 = vld [vmem:[%s148] sm:$0xff]
                %151 = vst [vmem:[%s149] sm:$0xff] %v150
                %v152 = vld [vmem:[%s148 + $0x8] sm:$0xff]
                %153 = vst [vmem:[%s149 + $0x8] sm:$0xff] %v152
                %v154 = vld [vmem:[%s148 + $0x10] sm:$0xff]
                %155 = vst [vmem:[%s149 + $0x10] sm:$0xff] %v154
                %v156 = vld [vmem:[%s148 + $0x18] sm:$0xff]
                %157 = vst [vmem:[%s149 + $0x18] sm:$0xff] %v156
                %v158 = vld [vmem:[%s148 + $0x40] sm:$0xff]
                %159 = vst [vmem:[%s149 + $0x20] sm:$0xff] %v158
                %v160 = vld [vmem:[%s148 + $0x48] sm:$0xff]
                %161 = vst [vmem:[%s149 + $0x28] sm:$0xff] %v160
                %v162 = vld [vmem:[%s148 + $0x50] sm:$0xff]
                %163 = vst [vmem:[%s149 + $0x30] sm:$0xff] %v162
                %v164 = vld [vmem:[%s148 + $0x58] sm:$0xff]
                %165 = vst [vmem:[%s149 + $0x38] sm:$0xff] %v164
                %v166 = vld [vmem:[%s148 + $0x80] sm:$0xff]
                %167 = vst [vmem:[%s149 + $0x40] sm:$0xff] %v166
                %v168 = vld [vmem:[%s148 + $0x88] sm:$0xff]
                %169 = vst [vmem:[%s149 + $0x48] sm:$0xff] %v168
                %v170 = vld [vmem:[%s148 + $0x90] sm:$0xff]
                %171 = vst [vmem:[%s149 + $0x50] sm:$0xff] %v170
                %v172 = vld [vmem:[%s148 + $0x98] sm:$0xff]
                %173 = vst [vmem:[%s149 + $0x58] sm:$0xff] %v172
              $region41: #{location_head_forward.9} parent=35 // loop_footer
                %s147 = sadd.s32 1, %s143
              $region42: #{location_head_forward.9} parent=35 // loop_footer_branch
                %142 = sbr.rel target = $region38
              $region43: #{location_head_forward.9} parent=35 // loop_exit
                _
            $region36: #{location_head_forward.9} parent=31 // pred_fallthru
              _
            // Predicated region
            $region44: #{location_head_forward.9} parent=31 // pred_check
              _
            $region45: #{location_head_forward.9} parent=31 // pred_check_branch
              %175 = sbr.rel target = $region47
            $region46: #{location_head_forward.9} parent=31 // pred_region
              _
            $region47: #{location_head_forward.9} parent=31 // pred_fallthru
              _
          $region32: #{location_head_forward.9} parent=27 // pred_fallthru
            _
          %176 = vnop
        $region28: #{location_head_forward.9} parent=23 // pred_fallthru
          _
      $region24: #{location_head_forward.9} parent=5 // pred_fallthru
        _
      %p177 = scmp.le.s32.totalorder 1, %s9
      %p178 = scmp.lt.s32.totalorder %s9, 3
      %p179 = pnand %p177, %p178
      %p180 = pneg %p179
      // Predicated region
      $region48: #{location_head_forward.9} parent=5 // pred_check
        _
      $region49: #{location_head_forward.9} parent=5 // pred_check_branch
        %182 = sbr.rel (%p179) target = $region51
      $region50: #{location_head_forward.9} parent=5 // pred_region
        %s183 = ssub.s32 %s9, 1
        %s184 = sand.u32 %s43, 1
        %s185 = sand.u32 %s43, 1
        %s186 = smul.addr %s185, 96
        %s187 = scalar_lea.vmem [#allocation2], %s186
        // Predicated region
        $region52: #{location_head_forward.9} parent=50 // pred_check
          %p188 = pneg %p56
        $region53: #{location_head_forward.9} parent=50 // pred_check_branch
          %190 = sbr.rel (%p188) target = $region55
        $region54: #{location_head_forward.9} parent=50 // pred_region
          _
        $region55: #{location_head_forward.9} parent=50 // pred_fallthru
          _
        %p191 = pneg %p30
        %p192 = pneg %p27
        %s193 = sand.u32 %s43, 1
        %s194 = sand.u32 %s43, 1
        %s195 = smul.addr %s194, 96
        %s196 = scalar_lea.vmem [#allocation2], %s195
        %p197 = pneg %p56
        %p198 = pneg %p53
        %p199 = pneg %p77
        %p200 = pneg %p74
        %p201 = pneg %p103
        %p202 = pneg %p100
        %s203 = smul.u32 8, %s14
        %p204 = scmp.lt.s32.totalorder %s203, 15
        %s205 = scalar_select %p204, %s203, 15
        %s206 = smul.addr %s205, 4
        %s207 = scalar_lea.vmem %s3, %s206
        %s208 = smul.u32 8, %s14
        %s209 = smul.u32 8, %s14
        %p210 = scmp.lt.s32.totalorder %s209, 15
        %s211 = scalar_select %p210, %s209, 15
        %s212 = smul.addr %s211, 4
        %s213 = scalar_lea.vmem %s3, %s212
        %s214 = smul.u32 8, %s14
        %v216 = vld [vmem:[%s0] sm:$0x3]
        %v217 = vld [vmem:[%s187] sm:$0xff]
        %v218 = vld [vmem:[%s187 + $0x8] sm:$0xff]
        %v219 = vld [vmem:[%s187 + $0x10] sm:$0xff]
        %v220 = vld [vmem:[%s187 + $0x18] sm:$0xff]
        %v221 = vld [vmem:[%s187 + $0x20] sm:$0xff]
        %v222 = vld [vmem:[%s187 + $0x28] sm:$0xff]
        %v223 = vld [vmem:[%s187 + $0x30] sm:$0xff]
        %v224 = vld [vmem:[%s187 + $0x38] sm:$0xff]
        %v225 = vld [vmem:[%s187 + $0x40] sm:$0x11]
        %v226 = vld [vmem:[%s187 + $0x48] sm:$0x11]
        %v227 = vld [vmem:[%s187 + $0x50] sm:$0x11]
        %v228 = vld [vmem:[%s187 + $0x58] sm:$0x11]
        %v229 = vld [vmem:[%s2] sm:$0xf]
        %231 = vset.pattern.permute.xlu0 0
        %232 = vperm.xlu0 %231, %v229
        %v233 = vpop.permute.xlu0 %232
        %v247 = vunpack.c.l.b16 %v217
        %v248 = vunpack.c.h.b16 %v217
        %v249 = vunpack.c.l.b16 %v218
        %v250 = vunpack.c.h.b16 %v218
        %v251 = vunpack.c.l.b16 %v219
        %v252 = vunpack.c.h.b16 %v219
        %v253 = vunpack.c.l.b16 %v220
        %v254 = vunpack.c.h.b16 %v220
        %v255 = vunpack.c.l.b16 %v221
        %v256 = vunpack.c.h.b16 %v221
        %v257 = vunpack.c.l.b16 %v222
        %v258 = vunpack.c.h.b16 %v222
        %v259 = vunpack.c.l.b16 %v223
        %v260 = vunpack.c.h.b16 %v223
        %v261 = vunpack.c.l.b16 %v224
        %v262 = vunpack.c.h.b16 %v224
        %v263 = vunpack.c.l.b16 %v225
        %v264 = vunpack.c.h.b16 %v225
        %v265 = vunpack.c.l.b16 %v226
        %v266 = vunpack.c.h.b16 %v226
        %v267 = vunpack.c.l.b16 %v227
        %v268 = vunpack.c.h.b16 %v227
        %v269 = vunpack.c.l.b16 %v228
        %v270 = vunpack.c.h.b16 %v228
        %v271 = vpack.c.b16 %v255, %v247
        %v272 = vpack.c.b16 %v256, %v248
        %v273 = vpack.c.b16 %v257, %v249
        %v274 = vpack.c.b16 %v258, %v250
        %v275 = vpack.c.b16 %v259, %v251
        %v276 = vpack.c.b16 %v260, %v252
        %v277 = vpack.c.b16 %v261, %v253
        %v278 = vpack.c.b16 %v262, %v254
        %v279 = vpack.c.b16 %v263, %v263
        %v280 = vpack.c.b16 %v264, %v264
        %v281 = vpack.c.b16 %v265, %v265
        %v282 = vpack.c.b16 %v266, %v266
        %v283 = vpack.c.b16 %v267, %v267
        %v284 = vpack.c.b16 %v268, %v268
        %v285 = vpack.c.b16 %v269, %v269
        %v286 = vpack.c.b16 %v270, %v270
        %vm295 = vcmask 146432
        %v297 = vsel %vm295, %v216, 0
        %vm299 = vcmask 1040384
        %v301 = vsel %vm299, %v279, 0
        %v304 = vsel %vm299, %v280, 0
        %v307 = vsel %vm299, %v281, 0
        %v310 = vsel %vm299, %v282, 0
        %v313 = vsel %vm299, %v283, 0
        %v316 = vsel %vm299, %v284, 0
        %v319 = vsel %vm299, %v285, 0
        %v322 = vsel %vm299, %v286, 0
        %324 = vmatprep.subr.bf16.mxu0 0
        %325 = vmatpush1.bf16.msra.mxu0 0
        %326 = vmatprep.subr.bf16.mxu0 0
        %327 = vmatpush1.bf16.msra.mxu0 0
        %328 = vmatprep.subr.bf16.mxu0 0
        %329 = vmatpush1.bf16.msra.mxu0 0
        %330 = vmatprep.subr.bf16.mxu0 0
        %331 = vmatpush1.bf16.msra.mxu0 0
        %332 = vmatprep.subr.bf16.mxu0 0
        %333 = vmatpush1.bf16.msra.mxu0 0
        %334 = vmatprep.subr.bf16.mxu0 0
        %335 = vmatpush1.bf16.msra.mxu0 0
        %336 = vmatprep.subr.bf16.mxu0 %v304
        %337 = vmatpush1.bf16.msra.mxu0 %v301
        %338 = vmatprep.subr.bf16.mxu0 %v272
        %339 = vmatpush1.bf16.msra.mxu0 %v271
        %340 = vmatprep.subr.bf16.mxu0 0
        %341 = vmatpush2.bf16.msra.mxu0 0
        %342 = vmatprep.subr.bf16.mxu0 0
        %343 = vmatpush2.bf16.msra.mxu0 0
        %344 = vmatprep.subr.bf16.mxu0 0
        %345 = vmatpush2.bf16.msra.mxu0 0
        %346 = vmatprep.subr.bf16.mxu0 0
        %347 = vmatpush2.bf16.msra.mxu0 0
        %348 = vmatprep.subr.bf16.mxu0 0
        %349 = vmatpush2.bf16.msra.mxu0 0
        %350 = vmatprep.subr.bf16.mxu0 0
        %351 = vmatpush2.bf16.msra.mxu0 0
        %352 = vmatprep.subr.bf16.mxu0 0
        %353 = vmatpush2.bf16.msra.mxu0 0
        %354 = vmatprep.subr.bf16.mxu0 0
        %355 = vmatpush2.bf16.msra.mxu0 0
        %356 = vmatprep.mubr.bf16.mxu0 0
        %357 = vmatmul.mubr.bf16.gmra.mxu0 %v297
        %v358 = vpop.f32.mrf.mxu0
        %v359 = vadd.f32 %v233, %v358
        %v360 = vpop.f32.mrf.mxu0
        %v361 = vadd.f32 %v233, %v360
        %v362 = vpop.f32.mrf.mxu0
        %v363 = vpop.f32.mrf.mxu0
        %364 = vdwg.mxu0
        %365 = vmatprep.subr.bf16.mxu0 0
        %366 = vmatpush1.bf16.msra.mxu0 0
        %367 = vmatprep.subr.bf16.mxu0 0
        %368 = vmatpush1.bf16.msra.mxu0 0
        %369 = vmatprep.subr.bf16.mxu0 0
        %370 = vmatpush1.bf16.msra.mxu0 0
        %371 = vmatprep.subr.bf16.mxu0 0
        %372 = vmatpush1.bf16.msra.mxu0 0
        %373 = vmatprep.subr.bf16.mxu0 0
        %374 = vmatpush1.bf16.msra.mxu0 0
        %375 = vmatprep.subr.bf16.mxu0 0
        %376 = vmatpush1.bf16.msra.mxu0 0
        %377 = vmatprep.subr.bf16.mxu0 %v310
        %378 = vmatpush1.bf16.msra.mxu0 %v307
        %379 = vmatprep.subr.bf16.mxu0 %v274
        %380 = vmatpush1.bf16.msra.mxu0 %v273
        %381 = vmatprep.subr.bf16.mxu0 0
        %382 = vmatpush2.bf16.msra.mxu0 0
        %383 = vmatprep.subr.bf16.mxu0 0
        %384 = vmatpush2.bf16.msra.mxu0 0
        %385 = vmatprep.subr.bf16.mxu0 0
        %386 = vmatpush2.bf16.msra.mxu0 0
        %387 = vmatprep.subr.bf16.mxu0 0
        %388 = vmatpush2.bf16.msra.mxu0 0
        %389 = vmatprep.subr.bf16.mxu0 0
        %390 = vmatpush2.bf16.msra.mxu0 0
        %391 = vmatprep.subr.bf16.mxu0 0
        %392 = vmatpush2.bf16.msra.mxu0 0
        %393 = vmatprep.subr.bf16.mxu0 0
        %394 = vmatpush2.bf16.msra.mxu0 0
        %395 = vmatprep.subr.bf16.mxu0 0
        %396 = vmatpush2.bf16.msra.mxu0 0
        %397 = vmatprep.mubr.bf16.mxu0 0
        %398 = vmatmul.mubr.bf16.gmra.mxu0 %v297
        %v399 = vpop.f32.mrf.mxu0
        %v400 = vadd.f32 %v233, %v399
        %v401 = vpop.f32.mrf.mxu0
        %v402 = vadd.f32 %v233, %v401
        %v403 = vpop.f32.mrf.mxu0
        %v404 = vpop.f32.mrf.mxu0
        %405 = vdwg.mxu0
        %406 = vmatprep.subr.bf16.mxu0 0
        %407 = vmatpush1.bf16.msra.mxu0 0
        %408 = vmatprep.subr.bf16.mxu0 0
        %409 = vmatpush1.bf16.msra.mxu0 0
        %410 = vmatprep.subr.bf16.mxu0 0
        %411 = vmatpush1.bf16.msra.mxu0 0
        %412 = vmatprep.subr.bf16.mxu0 0
        %413 = vmatpush1.bf16.msra.mxu0 0
        %414 = vmatprep.subr.bf16.mxu0 0
        %415 = vmatpush1.bf16.msra.mxu0 0
        %416 = vmatprep.subr.bf16.mxu0 0
        %417 = vmatpush1.bf16.msra.mxu0 0
        %418 = vmatprep.subr.bf16.mxu0 %v316
        %419 = vmatpush1.bf16.msra.mxu0 %v313
        %420 = vmatprep.subr.bf16.mxu0 %v276
        %421 = vmatpush1.bf16.msra.mxu0 %v275
        %422 = vmatprep.subr.bf16.mxu0 0
        %423 = vmatpush2.bf16.msra.mxu0 0
        %424 = vmatprep.subr.bf16.mxu0 0
        %425 = vmatpush2.bf16.msra.mxu0 0
        %426 = vmatprep.subr.bf16.mxu0 0
        %427 = vmatpush2.bf16.msra.mxu0 0
        %428 = vmatprep.subr.bf16.mxu0 0
        %429 = vmatpush2.bf16.msra.mxu0 0
        %430 = vmatprep.subr.bf16.mxu0 0
        %431 = vmatpush2.bf16.msra.mxu0 0
        %432 = vmatprep.subr.bf16.mxu0 0
        %433 = vmatpush2.bf16.msra.mxu0 0
        %434 = vmatprep.subr.bf16.mxu0 0
        %435 = vmatpush2.bf16.msra.mxu0 0
        %436 = vmatprep.subr.bf16.mxu0 0
        %437 = vmatpush2.bf16.msra.mxu0 0
        %438 = vmatprep.mubr.bf16.mxu0 0
        %439 = vmatmul.mubr.bf16.gmra.mxu0 %v297
        %v440 = vpop.f32.mrf.mxu0
        %v441 = vadd.f32 %v233, %v440
        %v442 = vpop.f32.mrf.mxu0
        %v443 = vadd.f32 %v233, %v442
        %v444 = vpop.f32.mrf.mxu0
        %v445 = vpop.f32.mrf.mxu0
        %446 = vdwg.mxu0
        %447 = vmatprep.subr.bf16.mxu0 0
        %448 = vmatpush1.bf16.msra.mxu0 0
        %449 = vmatprep.subr.bf16.mxu0 0
        %450 = vmatpush1.bf16.msra.mxu0 0
        %451 = vmatprep.subr.bf16.mxu0 0
        %452 = vmatpush1.bf16.msra.mxu0 0
        %453 = vmatprep.subr.bf16.mxu0 0
        %454 = vmatpush1.bf16.msra.mxu0 0
        %455 = vmatprep.subr.bf16.mxu0 0
        %456 = vmatpush1.bf16.msra.mxu0 0
        %457 = vmatprep.subr.bf16.mxu0 0
        %458 = vmatpush1.bf16.msra.mxu0 0
        %459 = vmatprep.subr.bf16.mxu0 %v322
        %460 = vmatpush1.bf16.msra.mxu0 %v319
        %461 = vmatprep.subr.bf16.mxu0 %v278
        %462 = vmatpush1.bf16.msra.mxu0 %v277
        %463 = vmatprep.subr.bf16.mxu0 0
        %464 = vmatpush2.bf16.msra.mxu0 0
        %465 = vmatprep.subr.bf16.mxu0 0
        %466 = vmatpush2.bf16.msra.mxu0 0
        %467 = vmatprep.subr.bf16.mxu0 0
        %468 = vmatpush2.bf16.msra.mxu0 0
        %469 = vmatprep.subr.bf16.mxu0 0
        %470 = vmatpush2.bf16.msra.mxu0 0
        %471 = vmatprep.subr.bf16.mxu0 0
        %472 = vmatpush2.bf16.msra.mxu0 0
        %473 = vmatprep.subr.bf16.mxu0 0
        %474 = vmatpush2.bf16.msra.mxu0 0
        %475 = vmatprep.subr.bf16.mxu0 0
        %476 = vmatpush2.bf16.msra.mxu0 0
        %477 = vmatprep.subr.bf16.mxu0 0
        %478 = vmatpush2.bf16.msra.mxu0 0
        %479 = vmatprep.mubr.bf16.mxu0 0
        %480 = vmatmul.mubr.bf16.gmra.mxu0 %v297
        %v481 = vpop.f32.mrf.mxu0
        %v482 = vadd.f32 %v233, %v481
        %v483 = vpop.f32.mrf.mxu0
        %v484 = vadd.f32 %v233, %v483
        %v485 = vpop.f32.mrf.mxu0
        %v486 = vpop.f32.mrf.mxu0
        %487 = vdwg.mxu0
        %v488 = vmax.f32 %v359, 0.0
        %v489 = vmax.f32 %v361, 0.0
        %v490 = vmax.f32 %v400, 0.0
        %v491 = vmax.f32 %v402, 0.0
        %v492 = vmax.f32 %v441, 0.0
        %v493 = vmax.f32 %v443, 0.0
        %v494 = vmax.f32 %v482, 0.0
        %v495 = vmax.f32 %v484, 0.0
        %v504 = vcombine.low %v488, %v489
        %v505 = vcombine.low %v490, %v491
        %v506 = vcombine.low %v492, %v493
        %v507 = vcombine.low %v494, %v495
        %512 = vst [vmem:[%s213] sm:$0xff] %v504
        %513 = vst [vmem:[%s213 + $0x8] sm:$0xff] %v505
        %514 = vst [vmem:[%s213 + $0x10] sm:$0xff] %v506
        %515 = vst [vmem:[%s213 + $0x18] sm:$0xff] %v507
        %s516 = smul.u32 8, %s14
        %p517 = scmp.lt.s32.totalorder %s516, 15
        %s518 = scalar_select %p517, %s516, 15
        %s519 = smul.addr %s518, 4
        %s520 = scalar_lea.vmem %s3, %s519
        // Predicated region
        $region56: #{location_head_forward.9} parent=50 // pred_check
          %p521 = pneg %p100
        $region57: #{location_head_forward.9} parent=50 // pred_check_branch
          %523 = sbr.rel (%p521) target = $region59
        $region58: #{location_head_forward.9} parent=50 // pred_region
          %s524 = smul.u32 8, %s14
        $region59: #{location_head_forward.9} parent=50 // pred_fallthru
          _
      $region51: #{location_head_forward.9} parent=5 // pred_fallthru
        _
      %p525 = scmp.le.s32.totalorder 2, %s9
      // Predicated region
      $region60: #{location_head_forward.9} parent=5 // pred_check
        %p526 = pneg %p525
      $region61: #{location_head_forward.9} parent=5 // pred_check_branch
        %528 = sbr.rel (%p526) target = $region63
      $region62: #{location_head_forward.9} parent=5 // pred_region
        %s529 = ssub.s32 %s9, 2
        // Predicated region
        $region64: #{location_head_forward.9} parent=62 // pred_check
          %p530 = pneg %p106
        $region65: #{location_head_forward.9} parent=62 // pred_check_branch
          %532 = sbr.rel (%p530) target = $region67
        $region66: #{location_head_forward.9} parent=62 // pred_region
          %s533 = smul.u32 8, %s15
          %p534 = scmp.lt.s32.totalorder %s533, 15
          %s535 = scalar_select %p534, %s533, 15
          %s536 = smul.addr %s535, 4
          %s537 = scalar_lea.vmem %s3, %s536
        $region67: #{location_head_forward.9} parent=62 // pred_fallthru
          _
      $region63: #{location_head_forward.9} parent=5 // pred_fallthru
        _
    $region6: #{location_head_forward.9} parent=1 // loop_footer
      %s13 = sadd.s32 1, %s9
    $region7: #{location_head_forward.9} parent=1 // loop_footer_branch
      %8 = sbr.rel target = $region3
    $region8: #{location_head_forward.9} parent=1 // loop_exit
      _

// kernel: location_head_forward.10
$region0: #{location_head_forward.10}
  #allocation0 [shape = 'u32[]', space=smem, size = 0x4, offset = 0x4, fixed_abs, tag = 'smem constant byte address 0x4 - core index']
  #allocation1 [shape = 'u32[144,128]{1,0:T(1,128)}', space=vmem, size = 0x12000, scoped, tag = 'internal scratch']
  %s0 = inlined_call_operand.vmem [shape: f32[2,4096], index: 0, kind: input, shape index: {}]
  %s1 = inlined_call_operand.vmem [shape: f32[1,4096], index: 1, kind: input, shape index: {}]
  %s2 = inlined_call_operand.vmem [shape: f32[2,4096], index: 2, kind: output, shape index: {0}]
  %s3 = inlined_call_operand.vmem [shape: f32[2,4096], index: 3, kind: output, shape index: {1}]
  %4 = xla_tuple %s2, %s3
  %s5 = sld [smem:[#allocation0]]
  $region26: #{location_head_forward.10} parent=0
    _
  %s7 = ssub.s32 1, %s5
  %s8 = scalar_select 0, %s7, %s5
  // Predicated region
  $region2: #{location_head_forward.10} parent=0 // pred_check
    _
  $region3: #{location_head_forward.10} parent=0 // pred_check_branch
    %10 = sbr.rel (0) target = $region5
  $region4: #{location_head_forward.10} parent=0 // pred_region
    _
  $region5: #{location_head_forward.10} parent=0 // pred_fallthru
    _
  // Predicated region
  $region6: #{location_head_forward.10} parent=0 // pred_check
    _
  $region7: #{location_head_forward.10} parent=0 // pred_check_branch
    %12 = sbr.rel (0) target = $region9
  $region8: #{location_head_forward.10} parent=0 // pred_region
    _
  $region9: #{location_head_forward.10} parent=0 // pred_fallthru
    _
  %v13 = vld [vmem:[%s0] sm:$0xff]
  %v14 = vld [vmem:[%s0 + $0x8] sm:$0xff]
  %v15 = vld [vmem:[%s0 + $0x10] sm:$0xff]
  %v16 = vld [vmem:[%s0 + $0x18] sm:$0xff]
  %v17 = vld [vmem:[%s0 + $0x20] sm:$0xff]
  %v18 = vld [vmem:[%s0 + $0x28] sm:$0xff]
  %v19 = vld [vmem:[%s0 + $0x30] sm:$0xff]
  %v20 = vld [vmem:[%s0 + $0x38] sm:$0xff]
  %v21 = vld [vmem:[%s1] sm:$0xff]
  %v22 = vld [vmem:[%s1 + $0x8] sm:$0xff]
  %v23 = vld [vmem:[%s1 + $0x10] sm:$0xff]
  %v24 = vld [vmem:[%s1 + $0x18] sm:$0xff]
  %v29 = vlaneseq
  %v30 = vshrl.u32 %v29, 7
  %v31 = vsub.s32 0, %v30
  %v32 = vrot.slane %v21, %v31
  %v33 = vlaneseq
  %v34 = vshrl.u32 %v33, 7
  %v35 = vsub.s32 1, %v34
  %v36 = vrot.slane %v21, %v35
  %v37 = vlaneseq
  %v38 = vshrl.u32 %v37, 7
  %v39 = vsub.s32 2, %v38
  %v40 = vrot.slane %v21, %v39
  %v41 = vlaneseq
  %v42 = vshrl.u32 %v41, 7
  %v43 = vsub.s32 3, %v42
  %v44 = vrot.slane %v21, %v43
  %v45 = vlaneseq
  %v46 = vshrl.u32 %v45, 7
  %v47 = vsub.s32 4, %v46
  %v48 = vrot.slane %v21, %v47
  %v49 = vlaneseq
  %v50 = vshrl.u32 %v49, 7
  %v51 = vsub.s32 5, %v50
  %v52 = vrot.slane %v21, %v51
  %v53 = vlaneseq
  %v54 = vshrl.u32 %v53, 7
  %v55 = vsub.s32 6, %v54
  %v56 = vrot.slane %v21, %v55
  %v57 = vlaneseq
  %v58 = vshrl.u32 %v57, 7
  %v59 = vsub.s32 7, %v58
  %v60 = vrot.slane %v21, %v59
  %v61 = vlaneseq
  %v62 = vshrl.u32 %v61, 7
  %v63 = vsub.s32 0, %v62
  %v64 = vrot.slane %v22, %v63
  %v65 = vlaneseq
  %v66 = vshrl.u32 %v65, 7
  %v67 = vsub.s32 1, %v66
  %v68 = vrot.slane %v22, %v67
  %v69 = vlaneseq
  %v70 = vshrl.u32 %v69, 7
  %v71 = vsub.s32 2, %v70
  %v72 = vrot.slane %v22, %v71
  %v73 = vlaneseq
  %v74 = vshrl.u32 %v73, 7
  %v75 = vsub.s32 3, %v74
  %v76 = vrot.slane %v22, %v75
  %v77 = vlaneseq
  %v78 = vshrl.u32 %v77, 7
  %v79 = vsub.s32 4, %v78
  %v80 = vrot.slane %v22, %v79
  %v81 = vlaneseq
  %v82 = vshrl.u32 %v81, 7
  %v83 = vsub.s32 5, %v82
  %v84 = vrot.slane %v22, %v83
  %v85 = vlaneseq
  %v86 = vshrl.u32 %v85, 7
  %v87 = vsub.s32 6, %v86
  %v88 = vrot.slane %v22, %v87
  %v89 = vlaneseq
  %v90 = vshrl.u32 %v89, 7
  %v91 = vsub.s32 7, %v90
  %v92 = vrot.slane %v22, %v91
  %v93 = vlaneseq
  %v94 = vshrl.u32 %v93, 7
  %v95 = vsub.s32 0, %v94
  %v96 = vrot.slane %v23, %v95
  %v97 = vlaneseq
  %v98 = vshrl.u32 %v97, 7
  %v99 = vsub.s32 1, %v98
  %v100 = vrot.slane %v23, %v99
  %v101 = vlaneseq
  %v102 = vshrl.u32 %v101, 7
  %v103 = vsub.s32 2, %v102
  %v104 = vrot.slane %v23, %v103
  %v105 = vlaneseq
  %v106 = vshrl.u32 %v105, 7
  %v107 = vsub.s32 3, %v106
  %v108 = vrot.slane %v23, %v107
  %v109 = vlaneseq
  %v110 = vshrl.u32 %v109, 7
  %v111 = vsub.s32 4, %v110
  %v112 = vrot.slane %v23, %v111
  %v113 = vlaneseq
  %v114 = vshrl.u32 %v113, 7
  %v115 = vsub.s32 5, %v114
  %v116 = vrot.slane %v23, %v115
  %v117 = vlaneseq
  %v118 = vshrl.u32 %v117, 7
  %v119 = vsub.s32 6, %v118
  %v120 = vrot.slane %v23, %v119
  %v121 = vlaneseq
  %v122 = vshrl.u32 %v121, 7
  %v123 = vsub.s32 7, %v122
  %v124 = vrot.slane %v23, %v123
  %v125 = vlaneseq
  %v126 = vshrl.u32 %v125, 7
  %v127 = vsub.s32 0, %v126
  %v128 = vrot.slane %v24, %v127
  %v129 = vlaneseq
  %v130 = vshrl.u32 %v129, 7
  %v131 = vsub.s32 1, %v130
  %v132 = vrot.slane %v24, %v131
  %v133 = vlaneseq
  %v134 = vshrl.u32 %v133, 7
  %v135 = vsub.s32 2, %v134
  %v136 = vrot.slane %v24, %v135
  %v137 = vlaneseq
  %v138 = vshrl.u32 %v137, 7
  %v139 = vsub.s32 3, %v138
  %v140 = vrot.slane %v24, %v139
  %v141 = vlaneseq
  %v142 = vshrl.u32 %v141, 7
  %v143 = vsub.s32 4, %v142
  %v144 = vrot.slane %v24, %v143
  %v145 = vlaneseq
  %v146 = vshrl.u32 %v145, 7
  %v147 = vsub.s32 5, %v146
  %v148 = vrot.slane %v24, %v147
  %v149 = vlaneseq
  %v150 = vshrl.u32 %v149, 7
  %v151 = vsub.s32 6, %v150
  %v152 = vrot.slane %v24, %v151
  %v153 = vlaneseq
  %v154 = vshrl.u32 %v153, 7
  %v155 = vsub.s32 7, %v154
  %v156 = vrot.slane %v24, %v155
  %v157 = vcombine.low %v32, %v36
  %v158 = vcombine.low %v40, %v44
  %v160 = vunpack.c.l.s4 1983009808
  %v161 = vunpack.c.0.s8 %v160
  %v162 = vlaneseq
  %v163 = vshrl.u32 %v162, 7
  %v164 = vsub.s32 %v161, %v163
  %v165 = vrot.slane %v157, %v164
  %v167 = vunpack.c.l.s4 1983009808
  %v168 = vunpack.c.0.s8 %v167
  %v169 = vlaneseq
  %v170 = vshrl.u32 %v169, 7
  %v171 = vsub.s32 %v168, %v170
  %v172 = vrot.slane %v158, %v171
  %v173 = vcombine.low %v165, %v172
  %v174 = vcombine.low %v48, %v52
  %v175 = vcombine.low %v56, %v60
  %v177 = vunpack.c.l.s4 1983009808
  %v178 = vunpack.c.0.s8 %v177
  %v179 = vlaneseq
  %v180 = vshrl.u32 %v179, 7
  %v181 = vsub.s32 %v178, %v180
  %v182 = vrot.slane %v174, %v181
  %v184 = vunpack.c.l.s4 1983009808
  %v185 = vunpack.c.0.s8 %v184
  %v186 = vlaneseq
  %v187 = vshrl.u32 %v186, 7
  %v188 = vsub.s32 %v185, %v187
  %v189 = vrot.slane %v175, %v188
  %v190 = vcombine.low %v182, %v189
  %v191 = vcombine.low %v64, %v68
  %v192 = vcombine.low %v72, %v76
  %v194 = vunpack.c.l.s4 1983009808
  %v195 = vunpack.c.0.s8 %v194
  %v196 = vlaneseq
  %v197 = vshrl.u32 %v196, 7
  %v198 = vsub.s32 %v195, %v197
  %v199 = vrot.slane %v191, %v198
  %v201 = vunpack.c.l.s4 1983009808
  %v202 = vunpack.c.0.s8 %v201
  %v203 = vlaneseq
  %v204 = vshrl.u32 %v203, 7
  %v205 = vsub.s32 %v202, %v204
  %v206 = vrot.slane %v192, %v205
  %v207 = vcombine.low %v199, %v206
  %v208 = vcombine.low %v80, %v84
  %v209 = vcombine.low %v88, %v92
  %v211 = vunpack.c.l.s4 1983009808
  %v212 = vunpack.c.0.s8 %v211
  %v213 = vlaneseq
  %v214 = vshrl.u32 %v213, 7
  %v215 = vsub.s32 %v212, %v214
  %v216 = vrot.slane %v208, %v215
  %v218 = vunpack.c.l.s4 1983009808
  %v219 = vunpack.c.0.s8 %v218
  %v220 = vlaneseq
  %v221 = vshrl.u32 %v220, 7
  %v222 = vsub.s32 %v219, %v221
  %v223 = vrot.slane %v209, %v222
  %v224 = vcombine.low %v216, %v223
  %v225 = vcombine.low %v96, %v100
  %v226 = vcombine.low %v104, %v108
  %v228 = vunpack.c.l.s4 1983009808
  %v229 = vunpack.c.0.s8 %v228
  %v230 = vlaneseq
  %v231 = vshrl.u32 %v230, 7
  %v232 = vsub.s32 %v229, %v231
  %v233 = vrot.slane %v225, %v232
  %v235 = vunpack.c.l.s4 1983009808
  %v236 = vunpack.c.0.s8 %v235
  %v237 = vlaneseq
  %v238 = vshrl.u32 %v237, 7
  %v239 = vsub.s32 %v236, %v238
  %v240 = vrot.slane %v226, %v239
  %v241 = vcombine.low %v233, %v240
  %v242 = vcombine.low %v112, %v116
  %v243 = vcombine.low %v120, %v124
  %v245 = vunpack.c.l.s4 1983009808
  %v246 = vunpack.c.0.s8 %v245
  %v247 = vlaneseq
  %v248 = vshrl.u32 %v247, 7
  %v249 = vsub.s32 %v246, %v248
  %v250 = vrot.slane %v242, %v249
  %v252 = vunpack.c.l.s4 1983009808
  %v253 = vunpack.c.0.s8 %v252
  %v254 = vlaneseq
  %v255 = vshrl.u32 %v254, 7
  %v256 = vsub.s32 %v253, %v255
  %v257 = vrot.slane %v243, %v256
  %v258 = vcombine.low %v250, %v257
  %v259 = vcombine.low %v128, %v132
  %v260 = vcombine.low %v136, %v140
  %v262 = vunpack.c.l.s4 1983009808
  %v263 = vunpack.c.0.s8 %v262
  %v264 = vlaneseq
  %v265 = vshrl.u32 %v264, 7
  %v266 = vsub.s32 %v263, %v265
  %v267 = vrot.slane %v259, %v266
  %v269 = vunpack.c.l.s4 1983009808
  %v270 = vunpack.c.0.s8 %v269
  %v271 = vlaneseq
  %v272 = vshrl.u32 %v271, 7
  %v273 = vsub.s32 %v270, %v272
  %v274 = vrot.slane %v260, %v273
  %v275 = vcombine.low %v267, %v274
  %v276 = vcombine.low %v144, %v148
  %v277 = vcombine.low %v152, %v156
  %v279 = vunpack.c.l.s4 1983009808
  %v280 = vunpack.c.0.s8 %v279
  %v281 = vlaneseq
  %v282 = vshrl.u32 %v281, 7
  %v283 = vsub.s32 %v280, %v282
  %v284 = vrot.slane %v276, %v283
  %v286 = vunpack.c.l.s4 1983009808
  %v287 = vunpack.c.0.s8 %v286
  %v288 = vlaneseq
  %v289 = vshrl.u32 %v288, 7
  %v290 = vsub.s32 %v287, %v289
  %v291 = vrot.slane %v277, %v290
  %v292 = vcombine.low %v284, %v291
  %v301 = vadd.f32 %v13, %v173
  %v302 = vadd.f32 %v14, %v190
  %v303 = vadd.f32 %v15, %v207
  %v304 = vadd.f32 %v16, %v224
  %v305 = vadd.f32 %v17, %v241
  %v306 = vadd.f32 %v18, %v258
  %v307 = vadd.f32 %v19, %v275
  %v308 = vadd.f32 %v20, %v292
  %309 = vst [vmem:[%s2] sm:$0xff] %v301
  %310 = vst [vmem:[%s2 + $0x8] sm:$0xff] %v302
  %311 = vst [vmem:[%s2 + $0x10] sm:$0xff] %v303
  %312 = vst [vmem:[%s2 + $0x18] sm:$0xff] %v304
  %313 = vst [vmem:[%s2 + $0x20] sm:$0xff] %v305
  %314 = vst [vmem:[%s2 + $0x28] sm:$0xff] %v306
  %315 = vst [vmem:[%s2 + $0x30] sm:$0xff] %v307
  %316 = vst [vmem:[%s2 + $0x38] sm:$0xff] %v308
  %v325 = vcombine.high %v301, %v301
  %v327 = vunpack.c.l.s4 1983009808
  %v328 = vunpack.c.0.s8 %v327
  %v329 = vlaneseq
  %v330 = vshrl.u32 %v329, 7
  %v331 = vsub.s32 %v328, %v330
  %v332 = vrot.slane %v301, %v331
  %v334 = vunpack.c.l.s4 1983009808
  %v335 = vunpack.c.0.s8 %v334
  %v336 = vlaneseq
  %v337 = vshrl.u32 %v336, 7
  %v338 = vsub.s32 %v335, %v337
  %v339 = vrot.slane %v325, %v338
  %v340 = vcombine.high %v332, %v332
  %v341 = vcombine.high %v339, %v339
  %v342 = vcombine.high %v302, %v302
  %v344 = vunpack.c.l.s4 1983009808
  %v345 = vunpack.c.0.s8 %v344
  %v346 = vlaneseq
  %v347 = vshrl.u32 %v346, 7
  %v348 = vsub.s32 %v345, %v347
  %v349 = vrot.slane %v302, %v348
  %v351 = vunpack.c.l.s4 1983009808
  %v352 = vunpack.c.0.s8 %v351
  %v353 = vlaneseq
  %v354 = vshrl.u32 %v353, 7
  %v355 = vsub.s32 %v352, %v354
  %v356 = vrot.slane %v342, %v355
  %v357 = vcombine.high %v349, %v349
  %v358 = vcombine.high %v356, %v356
  %v359 = vcombine.high %v303, %v303
  %v361 = vunpack.c.l.s4 1983009808
  %v362 = vunpack.c.0.s8 %v361
  %v363 = vlaneseq
  %v364 = vshrl.u32 %v363, 7
  %v365 = vsub.s32 %v362, %v364
  %v366 = vrot.slane %v303, %v365
  %v368 = vunpack.c.l.s4 1983009808
  %v369 = vunpack.c.0.s8 %v368
  %v370 = vlaneseq
  %v371 = vshrl.u32 %v370, 7
  %v372 = vsub.s32 %v369, %v371
  %v373 = vrot.slane %v359, %v372
  %v374 = vcombine.high %v366, %v366
  %v375 = vcombine.high %v373, %v373
  %v376 = vcombine.high %v304, %v304
  %v378 = vunpack.c.l.s4 1983009808
  %v379 = vunpack.c.0.s8 %v378
  %v380 = vlaneseq
  %v381 = vshrl.u32 %v380, 7
  %v382 = vsub.s32 %v379, %v381
  %v383 = vrot.slane %v304, %v382
  %v385 = vunpack.c.l.s4 1983009808
  %v386 = vunpack.c.0.s8 %v385
  %v387 = vlaneseq
  %v388 = vshrl.u32 %v387, 7
  %v389 = vsub.s32 %v386, %v388
  %v390 = vrot.slane %v376, %v389
  %v391 = vcombine.high %v383, %v383
  %v392 = vcombine.high %v390, %v390
  %v393 = vcombine.high %v305, %v305
  %v395 = vunpack.c.l.s4 1983009808
  %v396 = vunpack.c.0.s8 %v395
  %v397 = vlaneseq
  %v398 = vshrl.u32 %v397, 7
  %v399 = vsub.s32 %v396, %v398
  %v400 = vrot.slane %v305, %v399
  %v402 = vunpack.c.l.s4 1983009808
  %v403 = vunpack.c.0.s8 %v402
  %v404 = vlaneseq
  %v405 = vshrl.u32 %v404, 7
  %v406 = vsub.s32 %v403, %v405
  %v407 = vrot.slane %v393, %v406
  %v408 = vcombine.high %v400, %v400
  %v409 = vcombine.high %v407, %v407
  %v410 = vcombine.high %v306, %v306
  %v412 = vunpack.c.l.s4 1983009808
  %v413 = vunpack.c.0.s8 %v412
  %v414 = vlaneseq
  %v415 = vshrl.u32 %v414, 7
  %v416 = vsub.s32 %v413, %v415
  %v417 = vrot.slane %v306, %v416
  %v419 = vunpack.c.l.s4 1983009808
  %v420 = vunpack.c.0.s8 %v419
  %v421 = vlaneseq
  %v422 = vshrl.u32 %v421, 7
  %v423 = vsub.s32 %v420, %v422
  %v424 = vrot.slane %v410, %v423
  %v425 = vcombine.high %v417, %v417
  %v426 = vcombine.high %v424, %v424
  %v427 = vcombine.high %v307, %v307
  %v429 = vunpack.c.l.s4 1983009808
  %v430 = vunpack.c.0.s8 %v429
  %v431 = vlaneseq
  %v432 = vshrl.u32 %v431, 7
  %v433 = vsub.s32 %v430, %v432
  %v434 = vrot.slane %v307, %v433
  %v436 = vunpack.c.l.s4 1983009808
  %v437 = vunpack.c.0.s8 %v436
  %v438 = vlaneseq
  %v439 = vshrl.u32 %v438, 7
  %v440 = vsub.s32 %v437, %v439
  %v441 = vrot.slane %v427, %v440
  %v442 = vcombine.high %v434, %v434
  %v443 = vcombine.high %v441, %v441
  %v444 = vcombine.high %v308, %v308
  %v446 = vunpack.c.l.s4 1983009808
  %v447 = vunpack.c.0.s8 %v446
  %v448 = vlaneseq
  %v449 = vshrl.u32 %v448, 7
  %v450 = vsub.s32 %v447, %v449
  %v451 = vrot.slane %v308, %v450
  %v453 = vunpack.c.l.s4 1983009808
  %v454 = vunpack.c.0.s8 %v453
  %v455 = vlaneseq
  %v456 = vshrl.u32 %v455, 7
  %v457 = vsub.s32 %v454, %v456
  %v458 = vrot.slane %v444, %v457
  %v459 = vcombine.high %v451, %v451
  %v460 = vcombine.high %v458, %v458
  %vm493 = vcmask 1041408
  %v494 = vsel %vm493, %v332, -inf
  %v495 = vsel %vm493, %v340, -inf
  %v496 = vsel %vm493, %v339, -inf
  %v497 = vsel %vm493, %v341, -inf
  %v498 = vsel %vm493, %v349, -inf
  %v499 = vmax.f32 %v494, %v498
  %v500 = vsel %vm493, %v357, -inf
  %v501 = vmax.f32 %v495, %v500
  %v502 = vsel %vm493, %v356, -inf
  %v503 = vmax.f32 %v496, %v502
  %v504 = vsel %vm493, %v358, -inf
  %v505 = vmax.f32 %v497, %v504
  %v506 = vsel %vm493, %v366, -inf
  %v507 = vmax.f32 %v499, %v506
  %v508 = vsel %vm493, %v374, -inf
  %v509 = vmax.f32 %v501, %v508
  %v510 = vsel %vm493, %v373, -inf
  %v511 = vmax.f32 %v503, %v510
  %v512 = vsel %vm493, %v375, -inf
  %v513 = vmax.f32 %v505, %v512
  %v514 = vsel %vm493, %v383, -inf
  %v515 = vmax.f32 %v507, %v514
  %v516 = vsel %vm493, %v391, -inf
  %v517 = vmax.f32 %v509, %v516
  %v518 = vsel %vm493, %v390, -inf
  %v519 = vmax.f32 %v511, %v518
  %v520 = vsel %vm493, %v392, -inf
  %v521 = vmax.f32 %v513, %v520
  %v522 = vsel %vm493, %v400, -inf
  %v523 = vmax.f32 %v515, %v522
  %v524 = vsel %vm493, %v408, -inf
  %v525 = vmax.f32 %v517, %v524
  %v526 = vsel %vm493, %v407, -inf
  %v527 = vmax.f32 %v519, %v526
  %v528 = vsel %vm493, %v409, -inf
  %v529 = vmax.f32 %v521, %v528
  %v530 = vsel %vm493, %v417, -inf
  %v531 = vmax.f32 %v523, %v530
  %v532 = vsel %vm493, %v425, -inf
  %v533 = vmax.f32 %v525, %v532
  %v534 = vsel %vm493, %v424, -inf
  %v535 = vmax.f32 %v527, %v534
  %v536 = vsel %vm493, %v426, -inf
  %v537 = vmax.f32 %v529, %v536
  %v538 = vsel %vm493, %v434, -inf
  %v539 = vmax.f32 %v531, %v538
  %v540 = vsel %vm493, %v442, -inf
  %v541 = vmax.f32 %v533, %v540
  %v542 = vsel %vm493, %v441, -inf
  %v543 = vmax.f32 %v535, %v542
  %v544 = vsel %vm493, %v443, -inf
  %v545 = vmax.f32 %v537, %v544
  %v546 = vsel %vm493, %v451, -inf
  %v547 = vmax.f32 %v539, %v546
  %v548 = vsel %vm493, %v459, -inf
  %v549 = vmax.f32 %v541, %v548
  %v550 = vsel %vm493, %v458, -inf
  %v551 = vmax.f32 %v543, %v550
  %v552 = vsel %vm493, %v460, -inf
  %v553 = vmax.f32 %v545, %v552
  %v554 = vmax.f32 %v547, %v549
  %v555 = vmax.f32 %v551, %v553
  %v556 = vmax.f32 %v554, %v555
  %557 = vmax.xlane.f32.xlu0 %v556
  %v558 = vpop.xlane.xlu0 %557
  %v561 = vunpack.c.l.s4 269488144
  %v562 = vunpack.c.0.s8 %v561
  %v563 = vlaneseq
  %v564 = vshrl.u32 %v563, 7
  %v565 = vsub.s32 %v562, %v564
  %v566 = vrot.slane %v558, %v565
  %v568 = vsub.f32 %v301, %v566
  %v569 = vsub.f32 %v302, %v566
  %v570 = vsub.f32 %v303, %v566
  %v571 = vsub.f32 %v304, %v566
  %v572 = vsub.f32 %v305, %v566
  %v573 = vsub.f32 %v306, %v566
  %v574 = vsub.f32 %v307, %v566
  %v575 = vsub.f32 %v308, %v566
  %v576 = vmul.f32 %v568, 1.442695
  %v577 = vpow.pop %v576
  %v578 = vmul.f32 %v569, 1.442695
  %v579 = vpow.pop %v578
  %v580 = vmul.f32 %v570, 1.442695
  %v581 = vpow.pop %v580
  %v582 = vmul.f32 %v571, 1.442695
  %v583 = vpow.pop %v582
  %v584 = vmul.f32 %v572, 1.442695
  %v585 = vpow.pop %v584
  %v586 = vmul.f32 %v573, 1.442695
  %v587 = vpow.pop %v586
  %v588 = vmul.f32 %v574, 1.442695
  %v589 = vpow.pop %v588
  %v590 = vmul.f32 %v575, 1.442695
  %v591 = vpow.pop %v590
  %v600 = vcombine.high %v577, %v577
  %v602 = vunpack.c.l.s4 1983009808
  %v603 = vunpack.c.0.s8 %v602
  %v604 = vlaneseq
  %v605 = vshrl.u32 %v604, 7
  %v606 = vsub.s32 %v603, %v605
  %v607 = vrot.slane %v577, %v606
  %v609 = vunpack.c.l.s4 1983009808
  %v610 = vunpack.c.0.s8 %v609
  %v611 = vlaneseq
  %v612 = vshrl.u32 %v611, 7
  %v613 = vsub.s32 %v610, %v612
  %v614 = vrot.slane %v600, %v613
  %v615 = vcombine.high %v607, %v607
  %v616 = vcombine.high %v614, %v614
  %v617 = vcombine.high %v579, %v579
  %v619 = vunpack.c.l.s4 1983009808
  %v620 = vunpack.c.0.s8 %v619
  %v621 = vlaneseq
  %v622 = vshrl.u32 %v621, 7
  %v623 = vsub.s32 %v620, %v622
  %v624 = vrot.slane %v579, %v623
  %v626 = vunpack.c.l.s4 1983009808
  %v627 = vunpack.c.0.s8 %v626
  %v628 = vlaneseq
  %v629 = vshrl.u32 %v628, 7
  %v630 = vsub.s32 %v627, %v629
  %v631 = vrot.slane %v617, %v630
  %v632 = vcombine.high %v624, %v624
  %v633 = vcombine.high %v631, %v631
  %v634 = vcombine.high %v581, %v581
  %v636 = vunpack.c.l.s4 1983009808
  %v637 = vunpack.c.0.s8 %v636
  %v638 = vlaneseq
  %v639 = vshrl.u32 %v638, 7
  %v640 = vsub.s32 %v637, %v639
  %v641 = vrot.slane %v581, %v640
  %v643 = vunpack.c.l.s4 1983009808
  %v644 = vunpack.c.0.s8 %v643
  %v645 = vlaneseq
  %v646 = vshrl.u32 %v645, 7
  %v647 = vsub.s32 %v644, %v646
  %v648 = vrot.slane %v634, %v647
  %v649 = vcombine.high %v641, %v641
  %v650 = vcombine.high %v648, %v648
  %v651 = vcombine.high %v583, %v583
  %v653 = vunpack.c.l.s4 1983009808
  %v654 = vunpack.c.0.s8 %v653
  %v655 = vlaneseq
  %v656 = vshrl.u32 %v655, 7
  %v657 = vsub.s32 %v654, %v656
  %v658 = vrot.slane %v583, %v657
  %v660 = vunpack.c.l.s4 1983009808
  %v661 = vunpack.c.0.s8 %v660
  %v662 = vlaneseq
  %v663 = vshrl.u32 %v662, 7
  %v664 = vsub.s32 %v661, %v663
  %v665 = vrot.slane %v651, %v664
  %v666 = vcombine.high %v658, %v658
  %v667 = vcombine.high %v665, %v665
  %v668 = vcombine.high %v585, %v585
  %v670 = vunpack.c.l.s4 1983009808
  %v671 = vunpack.c.0.s8 %v670
  %v672 = vlaneseq
  %v673 = vshrl.u32 %v672, 7
  %v674 = vsub.s32 %v671, %v673
  %v675 = vrot.slane %v585, %v674
  %v677 = vunpack.c.l.s4 1983009808
  %v678 = vunpack.c.0.s8 %v677
  %v679 = vlaneseq
  %v680 = vshrl.u32 %v679, 7
  %v681 = vsub.s32 %v678, %v680
  %v682 = vrot.slane %v668, %v681
  %v683 = vcombine.high %v675, %v675
  %v684 = vcombine.high %v682, %v682
  %v685 = vcombine.high %v587, %v587
  %v687 = vunpack.c.l.s4 1983009808
  %v688 = vunpack.c.0.s8 %v687
  %v689 = vlaneseq
  %v690 = vshrl.u32 %v689, 7
  %v691 = vsub.s32 %v688, %v690
  %v692 = vrot.slane %v587, %v691
  %v694 = vunpack.c.l.s4 1983009808
  %v695 = vunpack.c.0.s8 %v694
  %v696 = vlaneseq
  %v697 = vshrl.u32 %v696, 7
  %v698 = vsub.s32 %v695, %v697
  %v699 = vrot.slane %v685, %v698
  %v700 = vcombine.high %v692, %v692
  %v701 = vcombine.high %v699, %v699
  %v702 = vcombine.high %v589, %v589
  %v704 = vunpack.c.l.s4 1983009808
  %v705 = vunpack.c.0.s8 %v704
  %v706 = vlaneseq
  %v707 = vshrl.u32 %v706, 7
  %v708 = vsub.s32 %v705, %v707
  %v709 = vrot.slane %v589, %v708
  %v711 = vunpack.c.l.s4 1983009808
  %v712 = vunpack.c.0.s8 %v711
  %v713 = vlaneseq
  %v714 = vshrl.u32 %v713, 7
  %v715 = vsub.s32 %v712, %v714
  %v716 = vrot.slane %v702, %v715
  %v717 = vcombine.high %v709, %v709
  %v718 = vcombine.high %v716, %v716
  %v719 = vcombine.high %v591, %v591
  %v721 = vunpack.c.l.s4 1983009808
  %v722 = vunpack.c.0.s8 %v721
  %v723 = vlaneseq
  %v724 = vshrl.u32 %v723, 7
  %v725 = vsub.s32 %v722, %v724
  %v726 = vrot.slane %v591, %v725
  %v728 = vunpack.c.l.s4 1983009808
  %v729 = vunpack.c.0.s8 %v728
  %v730 = vlaneseq
  %v731 = vshrl.u32 %v730, 7
  %v732 = vsub.s32 %v729, %v731
  %v733 = vrot.slane %v719, %v732
  %v734 = vcombine.high %v726, %v726
  %v735 = vcombine.high %v733, %v733
  %v768 = vsel %vm493, %v607, 0.0
  %v769 = vsel %vm493, %v615, 0.0
  %v770 = vadd.f32 %v768, %v769
  %v771 = vsel %vm493, %v614, 0.0
  %v772 = vadd.f32 %v770, %v771
  %v773 = vsel %vm493, %v616, 0.0
  %v774 = vadd.f32 %v772, %v773
  %v775 = vsel %vm493, %v624, 0.0
  %v776 = vadd.f32 %v774, %v775
  %v777 = vsel %vm493, %v632, 0.0
  %v778 = vadd.f32 %v776, %v777
  %v779 = vsel %vm493, %v631, 0.0
  %v780 = vadd.f32 %v778, %v779
  %v781 = vsel %vm493, %v633, 0.0
  %v782 = vadd.f32 %v780, %v781
  %v783 = vsel %vm493, %v641, 0.0
  %v784 = vadd.f32 %v782, %v783
  %v785 = vsel %vm493, %v649, 0.0
  %v786 = vadd.f32 %v784, %v785
  %v787 = vsel %vm493, %v648, 0.0
  %v788 = vadd.f32 %v786, %v787
  %v789 = vsel %vm493, %v650, 0.0
  %v790 = vadd.f32 %v788, %v789
  %v791 = vsel %vm493, %v658, 0.0
  %v792 = vadd.f32 %v790, %v791
  %v793 = vsel %vm493, %v666, 0.0
  %v794 = vadd.f32 %v792, %v793
  %v795 = vsel %vm493, %v665, 0.0
  %v796 = vadd.f32 %v794, %v795
  %v797 = vsel %vm493, %v667, 0.0
  %v798 = vadd.f32 %v796, %v797
  %v799 = vsel %vm493, %v675, 0.0
  %v800 = vadd.f32 %v798, %v799
  %v801 = vsel %vm493, %v683, 0.0
  %v802 = vadd.f32 %v800, %v801
  %v803 = vsel %vm493, %v682, 0.0
  %v804 = vadd.f32 %v802, %v803
  %v805 = vsel %vm493, %v684, 0.0
  %v806 = vadd.f32 %v804, %v805
  %v807 = vsel %vm493, %v692, 0.0
  %v808 = vadd.f32 %v806, %v807
  %v809 = vsel %vm493, %v700, 0.0
  %v810 = vadd.f32 %v808, %v809
  %v811 = vsel %vm493, %v699, 0.0
  %v812 = vadd.f32 %v810, %v811
  %v813 = vsel %vm493, %v701, 0.0
  %v814 = vadd.f32 %v812, %v813
  %v815 = vsel %vm493, %v709, 0.0
  %v816 = vadd.f32 %v814, %v815
  %v817 = vsel %vm493, %v717, 0.0
  %v818 = vadd.f32 %v816, %v817
  %v819 = vsel %vm493, %v716, 0.0
  %v820 = vadd.f32 %v818, %v819
  %v821 = vsel %vm493, %v718, 0.0
  %v822 = vadd.f32 %v820, %v821
  %v823 = vsel %vm493, %v726, 0.0
  %v824 = vadd.f32 %v822, %v823
  %v825 = vsel %vm493, %v734, 0.0
  %v826 = vadd.f32 %v824, %v825
  %v827 = vsel %vm493, %v733, 0.0
  %v828 = vadd.f32 %v826, %v827
  %v829 = vsel %vm493, %v735, 0.0
  %v830 = vadd.f32 %v828, %v829
  %831 = vadd.xlane.f32.xlu0 %v830
  %v832 = vpop.xlane.xlu0 %831
  %v833 = vlog2.pop %v832
  %v834 = vmul.f32 %v833, 0.6931472
  %v835 = vadd.f32 %v834, %v558
  %v838 = vunpack.c.l.s4 269488144
  %v839 = vunpack.c.0.s8 %v838
  %v840 = vlaneseq
  %v841 = vshrl.u32 %v840, 7
  %v842 = vsub.s32 %v839, %v841
  %v843 = vrot.slane %v835, %v842
  %v845 = vsub.f32 %v301, %v843
  %v846 = vsub.f32 %v302, %v843
  %v847 = vsub.f32 %v303, %v843
  %v848 = vsub.f32 %v304, %v843
  %v849 = vsub.f32 %v305, %v843
  %v850 = vsub.f32 %v306, %v843
  %v851 = vsub.f32 %v307, %v843
  %v852 = vsub.f32 %v308, %v843
  %853 = vst [vmem:[%s3] sm:$0xff] %v845
  %854 = vst [vmem:[%s3 + $0x8] sm:$0xff] %v846
  %855 = vst [vmem:[%s3 + $0x10] sm:$0xff] %v847
  %856 = vst [vmem:[%s3 + $0x18] sm:$0xff] %v848
  %857 = vst [vmem:[%s3 + $0x20] sm:$0xff] %v849
  %858 = vst [vmem:[%s3 + $0x28] sm:$0xff] %v850
  %859 = vst [vmem:[%s3 + $0x30] sm:$0xff] %v851
  %860 = vst [vmem:[%s3 + $0x38] sm:$0xff] %v852
  // Predicated region
  $region10: #{location_head_forward.10} parent=0 // pred_check
    _
  $region11: #{location_head_forward.10} parent=0 // pred_check_branch
    %862 = sbr.rel (0) target = $region13
  $region12: #{location_head_forward.10} parent=0 // pred_region
    _
  $region13: #{location_head_forward.10} parent=0 // pred_fallthru
    _
  // Predicated region
  $region14: #{location_head_forward.10} parent=0 // pred_check
    _
  $region15: #{location_head_forward.10} parent=0 // pred_check_branch
    %864 = sbr.rel (0) target = $region17
  $region16: #{location_head_forward.10} parent=0 // pred_region
    _
  $region17: #{location_head_forward.10} parent=0 // pred_fallthru
    _
  // Predicated region
  $region18: #{location_head_forward.10} parent=0 // pred_check
    _
  $region19: #{location_head_forward.10} parent=0 // pred_check_branch
    %866 = sbr.rel (0) target = $region21
  $region20: #{location_head_forward.10} parent=0 // pred_region
    _
  $region21: #{location_head_forward.10} parent=0 // pred_fallthru
    _
  // Predicated region
  $region22: #{location_head_forward.10} parent=0 // pred_check
    _
  $region23: #{location_head_forward.10} parent=0 // pred_check_branch
    %868 = sbr.rel (0) target = $region25
  $region24: #{location_head_forward.10} parent=0 // pred_region
    _
  $region25: #{location_head_forward.10} parent=0 // pred_fallthru
    _

// kernel: location_head_forward.11
$region0: #{location_head_forward.11}
  #allocation0 [shape = 'u32[]', space=smem, size = 0x4, offset = 0x4, fixed_abs, tag = 'smem constant byte address 0x4 - core index']
  #allocation1 [shape = 'u32[144,128]{1,0:T(1,128)}', space=vmem, size = 0x12000, scoped, tag = 'internal scratch']
  %s0 = inlined_call_operand.vmem [shape: f32[2,128], index: 0, kind: input, shape index: {}]
  %s1 = inlined_call_operand.vmem [shape: f32[128,64], index: 1, kind: input, shape index: {}]
  %s2 = inlined_call_operand.vmem [shape: f32[1,64], index: 2, kind: input, shape index: {}]
  %s3 = inlined_call_operand.vmem [shape: f32[2,64], index: 3, kind: input, shape index: {}]
  %s4 = inlined_call_operand.hbm [shape: f32[2,64], index: 4, kind: output, shape index: {}]
  %s5 = sld [smem:[#allocation0]]
  $region26: #{location_head_forward.11} parent=0
    _
  %s7 = ssub.s32 1, %s5
  %s8 = scalar_select 0, %s7, %s5
  $region1: #{location_head_forward.11} parent=0
    #allocation2 [shape = 'u8[1024]{0}', space=vmem, size = 0x400, scoped, tag = 'output window, operand 0, single buffered']
    #allocation3 [shape = 's32[1]{0}', space=sflag, size = 0x4, scoped, tag = 'scoped memory for location_head_forward.11']
    %9 = vsyncpa [#allocation3], 0
    // Predicated region
    $region2: #{location_head_forward.11} parent=1 // pred_check
      _
    $region3: #{location_head_forward.11} parent=1 // pred_check_branch
      %11 = sbr.rel (0) target = $region5
    $region4: #{location_head_forward.11} parent=1 // pred_region
      _
    $region5: #{location_head_forward.11} parent=1 // pred_fallthru
      _
    // Predicated region
    $region6: #{location_head_forward.11} parent=1 // pred_check
      _
    $region7: #{location_head_forward.11} parent=1 // pred_check_branch
      %13 = sbr.rel (0) target = $region9
    $region8: #{location_head_forward.11} parent=1 // pred_region
      _
    $region9: #{location_head_forward.11} parent=1 // pred_fallthru
      _
    // Predicated region
    $region10: #{location_head_forward.11} parent=1 // pred_check
      _
    $region11: #{location_head_forward.11} parent=1 // pred_check_branch
      %15 = sbr.rel (0) target = $region13
    $region12: #{location_head_forward.11} parent=1 // pred_region
      _
    $region13: #{location_head_forward.11} parent=1 // pred_fallthru
      _
    // Predicated region
    $region14: #{location_head_forward.11} parent=1 // pred_check
      _
    $region15: #{location_head_forward.11} parent=1 // pred_check_branch
      %17 = sbr.rel (0) target = $region17
    $region16: #{location_head_forward.11} parent=1 // pred_region
      _
    $region17: #{location_head_forward.11} parent=1 // pred_fallthru
      _
    %v18 = vld [vmem:[%s0] sm:$0x3]
    %v19 = vld [vmem:[%s1] sm:$0xff]
    %v20 = vld [vmem:[%s1 + $0x8] sm:$0xff]
    %v21 = vld [vmem:[%s1 + $0x10] sm:$0xff]
    %v22 = vld [vmem:[%s1 + $0x18] sm:$0xff]
    %v23 = vld [vmem:[%s1 + $0x20] sm:$0xff]
    %v24 = vld [vmem:[%s1 + $0x28] sm:$0xff]
    %v25 = vld [vmem:[%s1 + $0x30] sm:$0xff]
    %v26 = vld [vmem:[%s1 + $0x38] sm:$0xff]
    %v27 = vld [vmem:[%s1 + $0x40] sm:$0xff]
    %v28 = vld [vmem:[%s1 + $0x48] sm:$0xff]
    %v29 = vld [vmem:[%s1 + $0x50] sm:$0xff]
    %v30 = vld [vmem:[%s1 + $0x58] sm:$0xff]
    %v31 = vld [vmem:[%s1 + $0x60] sm:$0xff]
    %v32 = vld [vmem:[%s1 + $0x68] sm:$0xff]
    %v33 = vld [vmem:[%s1 + $0x70] sm:$0xff]
    %v34 = vld [vmem:[%s1 + $0x78] sm:$0xff]
    %v35 = vld [vmem:[%s2] sm:$0x1]
    %v37 = vlaneseq
    %v38 = vshrl.u32 %v37, 7
    %v39 = vsub.s32 0, %v38
    %v40 = vrot.slane %v35, %v39
    %42 = vmatprep.subr.mxu0 0.0
    %43 = vmatpush1.msra.mxu0 %v34
    %44 = vmatprep.subr.mxu0 0.0
    %45 = vmatpush1.msra.mxu0 %v33
    %46 = vmatprep.subr.mxu0 0.0
    %47 = vmatpush1.msra.mxu0 %v32
    %48 = vmatprep.subr.mxu0 0.0
    %49 = vmatpush1.msra.mxu0 %v31
    %50 = vmatprep.subr.mxu0 0.0
    %51 = vmatpush1.msra.mxu0 %v30
    %52 = vmatprep.subr.mxu0 0.0
    %53 = vmatpush1.msra.mxu0 %v29
    %54 = vmatprep.subr.mxu0 0.0
    %55 = vmatpush1.msra.mxu0 %v28
    %56 = vmatprep.subr.mxu0 0.0
    %57 = vmatpush1.msra.mxu0 %v27
    %58 = vmatprep.subr.mxu0 0.0
    %59 = vmatpush1.msra.mxu0 %v26
    %60 = vmatprep.subr.mxu0 0.0
    %61 = vmatpush1.msra.mxu0 %v25
    %62 = vmatprep.subr.mxu0 0.0
    %63 = vmatpush1.msra.mxu0 %v24
    %64 = vmatprep.subr.mxu0 0.0
    %65 = vmatpush1.msra.mxu0 %v23
    %66 = vmatprep.subr.mxu0 0.0
    %67 = vmatpush1.msra.mxu0 %v22
    %68 = vmatprep.subr.mxu0 0.0
    %69 = vmatpush1.msra.mxu0 %v21
    %70 = vmatprep.subr.mxu0 0.0
    %71 = vmatpush1.msra.mxu0 %v20
    %72 = vmatprep.subr.mxu0 0.0
    %73 = vmatpush1.msra.mxu0 %v19
    %74 = vmatprep.subr.mxu0 0.0
    %75 = vmatpush2.msra.mxu0 0.0
    %76 = vmatprep.subr.mxu0 0.0
    %77 = vmatpush2.msra.mxu0 0.0
    %78 = vmatprep.subr.mxu0 0.0
    %79 = vmatpush2.msra.mxu0 0.0
    %80 = vmatprep.subr.mxu0 0.0
    %81 = vmatpush2.msra.mxu0 0.0
    %82 = vmatprep.subr.mxu0 0.0
    %83 = vmatpush2.msra.mxu0 0.0
    %84 = vmatprep.subr.mxu0 0.0
    %85 = vmatpush2.msra.mxu0 0.0
    %86 = vmatprep.subr.mxu0 0.0
    %87 = vmatpush2.msra.mxu0 0.0
    %88 = vmatprep.subr.mxu0 0.0
    %89 = vmatpush2.msra.mxu0 0.0
    %90 = vmatprep.subr.mxu0 0.0
    %91 = vmatpush2.msra.mxu0 0.0
    %92 = vmatprep.subr.mxu0 0.0
    %93 = vmatpush2.msra.mxu0 0.0
    %94 = vmatprep.subr.mxu0 0.0
    %95 = vmatpush2.msra.mxu0 0.0
    %96 = vmatprep.subr.mxu0 0.0
    %97 = vmatpush2.msra.mxu0 0.0
    %98 = vmatprep.subr.mxu0 0.0
    %99 = vmatpush2.msra.mxu0 0.0
    %100 = vmatprep.subr.mxu0 0.0
    %101 = vmatpush2.msra.mxu0 0.0
    %102 = vmatprep.subr.mxu0 0.0
    %103 = vmatpush2.msra.mxu0 0.0
    %104 = vmatprep.subr.mxu0 0.0
    %105 = vmatpush2.msra.mxu0 0.0
    %106 = vmatprep.mubr.f32.mxu0 0.0
    %107 = vmatmul.mubr.f32.gmra.mxu0 %v18
    %v108 = vpop.f32.mrf.mxu0
    %v109 = vadd.f32 %v40, %v108
    %v110 = vpop.f32.mrf.mxu0
    %111 = vdwg.mxu0
    %v112 = vmax.f32 %v109, 0.0
    %v113 = vld [vmem:[%s3] sm:$0x3]
    %v114 = vadd.f32 %v112, %v113
    %vm115 = vcmask 517120
    %116 = vst.msk [vmem:[#allocation2] sm:$0x3] %vm115, %v114
    // Predicated region
    $region18: #{location_head_forward.11} parent=1 // pred_check
      _
    $region19: #{location_head_forward.11} parent=1 // pred_check_branch
      %118 = sbr.rel (0) target = $region21
    $region20: #{location_head_forward.11} parent=1 // pred_region
      %s120 = ssub.s32 32, 32
      %121 = vsyncadd [#allocation3], %s120
      %s123 = sshll.u32 [#allocation2], 4
      %s124 = int_to_ptr.vmem [resolvable:$true] %s123
      %126 = dma.vmem_to_hbm [thread:$0]  %s124, 32, %s4, [#allocation3]
    $region21: #{location_head_forward.11} parent=1 // pred_fallthru
      _
    // Predicated region
    $region22: #{location_head_forward.11} parent=1 // pred_check
      _
    $region23: #{location_head_forward.11} parent=1 // pred_check_branch
      %128 = sbr.rel (0) target = $region25
    $region24: #{location_head_forward.11} parent=1 // pred_region
      %129 = dma.done [#allocation3], 32
    $region25: #{location_head_forward.11} parent=1 // pred_fallthru
      _
    %130 = vsyncpa [#allocation3], 1

</llo_original>
